<compile_context>
chip_gen: v6e
topology: v6e:2x2x1
jax: 0.10.0
libtpu: 0.0.40
codegen_flags: <defaults>
</compile_context>

<pallas_src>
import jax
import jax.numpy as jnp
from jax import lax
from jax.experimental import pallas as pl
from jax.experimental.pallas import tpu as pltpu

INPUT_SIZE = 3
HIDDEN = 32          # 4*HIDDEN = 128 -> gate slab is exactly one lane-dense vreg row
NUM_LAYERS = 2
OUTPUT_STEPS = 6
BATCH = 2
SEQ = 8
B_PAD = 8            # pad batch to one full sublane group
K_PAD = 8            # pad input feature dim (3 -> 8) for the hoisted projection

# Row offsets of each section inside the packed (160, 128) parameter slab.
# Every section starts on a multiple of 8 rows -> sublane-aligned slices.
_WIH0 = 0     # (8, 128)  layer-0 input weights, K zero-padded 3 -> 8
_WHH0 = 8     # (32, 128) layer-0 recurrent weights
_B0 = 40      # (1, 128)  layer-0 combined bias (bih + bhh)   [rows 40..47 padded]
_W1H0 = 48    # (32, 128) layer-1 input (h0) weights
_W1H1 = 80    # (32, 128) layer-1 recurrent (h1) weights
_B1 = 112     # (1, 128)  layer-1 combined bias               [rows 112..119 padded]
_WFC = 120    # (32, 128) FC head weights, columns zero-padded 18 -> 128
_BFC = 152    # (1, 128)  FC head bias, zero-padded            [rows 152..159 padded]
_SLAB_ROWS = 160


def wind_lstm_kernel(x_ref,     # (T*B_PAD, K_PAD) time-major flattened, zero-padded input
                     p_ref,     # (160, 128)       packed parameter slab
                     out_ref):  # (B_PAD, 128)     lane-dense output tile
    H = HIDDEN
    G = 4 * H
    B = out_ref.shape[0]
    T = x_ref.shape[0] // B

    # --- carve the packed parameter slab (static, sublane-aligned slices) ----
    wih0 = p_ref[_WIH0:_WIH0 + K_PAD, :]      # (8, 128)
    whh0 = p_ref[_WHH0:_WHH0 + H, :]          # (32, 128)
    b0 = p_ref[_B0:_B0 + 1, :]                # (1, 128)
    w1h0 = p_ref[_W1H0:_W1H0 + H, :]          # (32, 128)
    w1h1 = p_ref[_W1H1:_W1H1 + H, :]          # (32, 128)
    b1 = p_ref[_B1:_B1 + 1, :]                # (1, 128)
    wfc = p_ref[_WFC:_WFC + H, :]             # (32, 128)
    bfc = p_ref[_BFC:_BFC + 1, :]             # (1, 128)

    # --- hoisted layer-0 input projection: one matmul for all timesteps -----
    xpre = jnp.dot(x_ref[...], wih0,
                   preferred_element_type=jnp.float32) + b0        # (T*B, 128)

    # --- fused gate activation ----------------------------------------------
    # gate order [i, f, o, g]: sigmoid on lanes [0, 3H), tanh on [3H, 4H).
    # The 0.5 pre-scale of sigmoid(z) = 0.5*tanh(z/2) + 0.5 is already folded
    # into the weights/biases, so only one multiply-add remains post-tanh.
    lane = lax.broadcasted_iota(jnp.int32, (1, G), 1)
    sig = lane < 3 * H
    sc = jnp.where(sig, 0.5, 1.0)
    ofs = jnp.where(sig, 0.5, 0.0)

    def activate(slab):
        return jnp.tanh(slab) * sc + ofs

    h0 = jnp.zeros((B, H), jnp.float32)
    c0 = jnp.zeros((B, H), jnp.float32)
    h1 = jnp.zeros((B, H), jnp.float32)
    c1 = jnp.zeros((B, H), jnp.float32)

    # --- fully-unrolled recurrence; state stays in vregs ---------------------
    # TODO(synk): could hold whh0 / w1h0 / w1h1 resident in the MXU via
    # pltpu.matmul_push_rhs + matmul_acc_lhs + matmul_pop to avoid re-loading
    # the same RHS into the systolic array every step.
    for t in range(T):
        # layer 0: only the recurrent matmul sits on the time-dependency chain.
        g0 = xpre[t * B:(t + 1) * B, :] + jnp.dot(
            h0, whh0, preferred_element_type=jnp.float32)
        a0 = activate(g0)
        c0 = a0[:, H:2 * H] * c0 + a0[:, 0:H] * a0[:, 3 * H:4 * H]
        h0 = a0[:, 2 * H:3 * H] * jnp.tanh(c0)

        # layer 1: two K=32 matmuls, no per-step concat/relayout.
        g1 = (jnp.dot(h0, w1h0, preferred_element_type=jnp.float32)
              + jnp.dot(h1, w1h1, preferred_element_type=jnp.float32) + b1)
        a1 = activate(g1)
        c1 = a1[:, H:2 * H] * c1 + a1[:, 0:H] * a1[:, 3 * H:4 * H]
        h1 = a1[:, 2 * H:3 * H] * jnp.tanh(c1)

    # --- FC head on the last hidden state, lane-dense (B, 128) store ---------
    # TODO(synk): nn.Dropout is identity at inference time; no stochastic drop.
    out_ref[...] = jnp.dot(h1, wfc, preferred_element_type=jnp.float32) + bfc


def wind_lstm_forward(x, slab):
    B, T, I = x.shape
    # time-major rows: row t*B_PAD + b == x[b, t, :]; pad batch -> 8 sublanes
    # and input features -> 8 lanes (zeros; padded weight rows are zero too).
    xt = jnp.transpose(x, (1, 0, 2))                          # (T, B, I)
    xt = jnp.pad(xt, ((0, 0), (0, B_PAD - B), (0, K_PAD - I)))
    x_flat = xt.reshape(T * B_PAD, K_PAD)

    out = pl.pallas_call(
        wind_lstm_kernel,
        out_shape=jax.ShapeDtypeStruct((B_PAD, 128), jnp.float32),
        in_specs=[pl.BlockSpec(memory_space=pltpu.MemorySpace.VMEM)] * 2,
        out_specs=pl.BlockSpec(memory_space=pltpu.MemorySpace.VMEM),
    )(x_flat, slab)
    return out[:B, :OUTPUT_STEPS * I].reshape(B, OUTPUT_STEPS, I)


# ----------------------------- parameters -----------------------------------

def init_params(key):
    """Raw PyTorch-layout params: U(-1/sqrt(H), 1/sqrt(H)), gate order i,f,g,o."""
    k = 1.0 / jnp.sqrt(jnp.float32(HIDDEN))
    keys = jax.random.split(key, 10)

    def u(kk, shape):
        return jax.random.uniform(kk, shape, jnp.float32, -k, k)

    return {
        "wih0": u(keys[0], (4 * HIDDEN, INPUT_SIZE)),
        "whh0": u(keys[1], (4 * HIDDEN, HIDDEN)),
        "bih0": u(keys[2], (4 * HIDDEN,)),
        "bhh0": u(keys[3], (4 * HIDDEN,)),
        "wih1": u(keys[4], (4 * HIDDEN, HIDDEN)),
        "whh1": u(keys[5], (4 * HIDDEN, HIDDEN)),
        "bih1": u(keys[6], (4 * HIDDEN,)),
        "bhh1": u(keys[7], (4 * HIDDEN,)),
        "wfc": u(keys[8], (OUTPUT_STEPS * INPUT_SIZE, HIDDEN)),
        "bfc": u(keys[9], (OUTPUT_STEPS * INPUT_SIZE,)),
    }


_GATE_ORDER = (0, 1, 3, 2)   # PyTorch i,f,g,o  ->  kernel i,f,o,g


def _fuse_w(w, in_dim):
    # (4H, in) PyTorch layout -> lane-dense (in, 4H) in kernel gate order.
    w4 = w.reshape(4, HIDDEN, in_dim)[jnp.array(_GATE_ORDER)]
    return jnp.transpose(w4, (2, 0, 1)).reshape(in_dim, 4 * HIDDEN)


def _fuse_b(bih, bhh):
    b4 = (bih + bhh).reshape(4, HIDDEN)[jnp.array(_GATE_ORDER)]
    return b4.reshape(1, 4 * HIDDEN)


def to_kernel_params(rp):
    """Fuse / reorder / pre-scale all params and pack them into one (160,128) slab."""
    H = HIDDEN
    G = 4 * H
    # fold the 0.5 pre-tanh scale of the sigmoid gates (lanes [0, 3H)) into the
    # weights and biases themselves (done once at parameter-prep time).
    gate_scale = jnp.concatenate(
        [jnp.full((3 * H,), 0.5, jnp.float32), jnp.ones((H,), jnp.float32)]
    ).reshape(1, G)

    def fw(w, in_dim):
        return _fuse_w(w, in_dim) * gate_scale

    def fb(bih, bhh):
        return _fuse_b(bih, bhh) * gate_scale

    def pad_rows(a, rows):
        return jnp.pad(a, ((0, rows - a.shape[0]), (0, 0)))

    def pad_cols(a, cols):
        return jnp.pad(a, ((0, 0), (0, cols - a.shape[1])))

    wih0 = pad_rows(fw(rp["wih0"], INPUT_SIZE), K_PAD)     # (8, 128)  K zero-padded
    whh0 = fw(rp["whh0"], H)                               # (32, 128)
    b0 = pad_rows(fb(rp["bih0"], rp["bhh0"]), 8)           # (8, 128)
    w1h0 = fw(rp["wih1"], H)                               # (32, 128)
    w1h1 = fw(rp["whh1"], H)                               # (32, 128)
    b1 = pad_rows(fb(rp["bih1"], rp["bhh1"]), 8)           # (8, 128)
    wfc = pad_cols(jnp.transpose(rp["wfc"]), 128)          # (32, 128) cols padded
    bfc = pad_rows(pad_cols(rp["bfc"].reshape(1, -1), 128), 8)  # (8, 128)

    slab = jnp.concatenate([wih0, whh0, b0, w1h0, w1h1, b1, wfc, bfc], axis=0)
    assert slab.shape == (_SLAB_ROWS, 128), slab.shape
    return slab


# ----------------------------- reference ------------------------------------

def ref_forward(x, rp):
    """Pure-JAX reference of the PyTorch forward pass (eval mode)."""
    B, T, _ = x.shape
    H = HIDDEN
    h = [jnp.zeros((B, H), jnp.float32) for _ in range(NUM_LAYERS)]
    c = [jnp.zeros((B, H), jnp.float32) for _ in range(NUM_LAYERS)]
    layers = [(rp["wih0"], rp["whh0"], rp["bih0"], rp["bhh0"]),
              (rp["wih1"], rp["whh1"], rp["bih1"], rp["bhh1"])]
    for t in range(T):
        inp = x[:, t, :]
        for l, (wih, whh, bih, bhh) in enumerate(layers):
            g = inp @ wih.T + h[l] @ whh.T + bih + bhh     # PyTorch order i,f,g,o
            i_g = jax.nn.sigmoid(g[:, 0:H])
            f_g = jax.nn.sigmoid(g[:, H:2 * H])
            g_g = jnp.tanh(g[:, 2 * H:3 * H])
            o_g = jax.nn.sigmoid(g[:, 3 * H:4 * H])
            c[l] = f_g * c[l] + i_g * g_g
            h[l] = o_g * jnp.tanh(c[l])
            inp = h[l]
    out = h[-1] @ rp["wfc"].T + rp["bfc"]
    return out.reshape(B, OUTPUT_STEPS, INPUT_SIZE)


if __name__ == "__main__":
    key = jax.random.PRNGKey(0)
    k_param, k_x = jax.random.split(key)
    raw = init_params(k_param)
    slab = to_kernel_params(raw)
    x = jax.random.normal(k_x, (BATCH, SEQ, INPUT_SIZE), jnp.float32)

    out = jax.block_until_ready(wind_lstm_forward(x, slab))
    ref = jax.block_until_ready(ref_forward(x, raw))

    assert out.shape == (BATCH, OUTPUT_STEPS, INPUT_SIZE), out.shape
    assert jnp.allclose(out, ref, atol=1e-4, rtol=1e-3), (
        float(jnp.max(jnp.abs(out - ref))))
    print("KERNEL_OK")
</pallas_src>

<mosaic_0001>
module attributes {stable_mosaic.version = 11 : i64} {
  func.func @wind_lstm_kernel(%arg0: memref<64x8xf32, #tpu.memory_space<vmem>>, %arg1: memref<160x128xf32, #tpu.memory_space<vmem>>, %arg2: memref<8x128xf32, #tpu.memory_space<vmem>>) attributes {dimension_semantics = [], scalar_prefetch = 0 : i64, scratch_operands = 0 : i64, tpu.core_type = #tpu.core_type<tc>} {
    %c0 = arith.constant 0 : index
    %c0_0 = arith.constant 0 : index
    %0 = vector.load %arg1[%c0, %c0_0] : memref<160x128xf32, #tpu.memory_space<vmem>>, vector<8x128xf32>
    %c8 = arith.constant 8 : index
    %c0_1 = arith.constant 0 : index
    %1 = vector.load %arg1[%c8, %c0_1] : memref<160x128xf32, #tpu.memory_space<vmem>>, vector<32x128xf32>
    %c40 = arith.constant 40 : index
    %c0_2 = arith.constant 0 : index
    %2 = vector.load %arg1[%c40, %c0_2] : memref<160x128xf32, #tpu.memory_space<vmem>>, vector<1x128xf32>
    %c48 = arith.constant 48 : index
    %c0_3 = arith.constant 0 : index
    %3 = vector.load %arg1[%c48, %c0_3] : memref<160x128xf32, #tpu.memory_space<vmem>>, vector<32x128xf32>
    %c80 = arith.constant 80 : index
    %c0_4 = arith.constant 0 : index
    %4 = vector.load %arg1[%c80, %c0_4] : memref<160x128xf32, #tpu.memory_space<vmem>>, vector<32x128xf32>
    %c112 = arith.constant 112 : index
    %c0_5 = arith.constant 0 : index
    %5 = vector.load %arg1[%c112, %c0_5] : memref<160x128xf32, #tpu.memory_space<vmem>>, vector<1x128xf32>
    %c120 = arith.constant 120 : index
    %c0_6 = arith.constant 0 : index
    %6 = vector.load %arg1[%c120, %c0_6] : memref<160x128xf32, #tpu.memory_space<vmem>>, vector<32x128xf32>
    %c152 = arith.constant 152 : index
    %c0_7 = arith.constant 0 : index
    %7 = vector.load %arg1[%c152, %c0_7] : memref<160x128xf32, #tpu.memory_space<vmem>>, vector<1x128xf32>
    %c0_8 = arith.constant 0 : index
    %c0_9 = arith.constant 0 : index
    %8 = vector.load %arg0[%c0_8, %c0_9] : memref<64x8xf32, #tpu.memory_space<vmem>>, vector<64x8xf32>
    %cst = arith.constant dense<0.000000e+00> : vector<64x128xf32>
    %9 = tpu.matmul %8, %0, %cst {dimension_numbers = #tpu.dot_dimension_numbers<[1], [0], [0], [1], [0, 0, 1, 1], [], []>} : vector<64x8xf32>, vector<8x128xf32>, vector<64x128xf32> -> vector<64x128xf32>
    %10 = vector.broadcast %2 : vector<1x128xf32> to vector<64x128xf32>
    %11 = arith.addf %9, %10 : vector<64x128xf32>
    %12 = tpu.iota {dimensions = array<i32: 1>} : vector<1x128xi32>
    %c96_i32 = arith.constant 96 : i32
    %13 = vector.broadcast %c96_i32 : i32 to vector<1x128xi32>
    %14 = arith.cmpi slt, %12, %13 : vector<1x128xi32>
    %cst_10 = arith.constant 5.000000e-01 : f32
    %cst_11 = arith.constant 1.000000e+00 : f32
    %15 = vector.broadcast %cst_10 : f32 to vector<1x128xf32>
    %16 = vector.broadcast %cst_11 : f32 to vector<1x128xf32>
    %17 = arith.select %14, %15, %16 : vector<1x128xi1>, vector<1x128xf32>
    %cst_12 = arith.constant 5.000000e-01 : f32
    %cst_13 = arith.constant 0.000000e+00 : f32
    %18 = vector.broadcast %cst_12 : f32 to vector<1x128xf32>
    %19 = vector.broadcast %cst_13 : f32 to vector<1x128xf32>
    %20 = arith.select %14, %18, %19 : vector<1x128xi1>, vector<1x128xf32>
    %cst_14 = arith.constant 0.000000e+00 : f32
    %21 = vector.broadcast %cst_14 : f32 to vector<8x32xf32>
    %cst_15 = arith.constant 0.000000e+00 : f32
    %22 = vector.broadcast %cst_15 : f32 to vector<8x32xf32>
    %cst_16 = arith.constant 0.000000e+00 : f32
    %23 = vector.broadcast %cst_16 : f32 to vector<8x32xf32>
    %cst_17 = arith.constant 0.000000e+00 : f32
    %24 = vector.broadcast %cst_17 : f32 to vector<8x32xf32>
    %25 = vector.extract_strided_slice %11 {offsets = [0, 0], sizes = [8, 128], strides = [1, 1]} : vector<64x128xf32> to vector<8x128xf32>
    %cst_18 = arith.constant dense<0.000000e+00> : vector<8x128xf32>
    %26 = tpu.matmul %21, %1, %cst_18 {dimension_numbers = #tpu.dot_dimension_numbers<[1], [0], [0], [1], [0, 0, 1, 1], [], []>} : vector<8x32xf32>, vector<32x128xf32>, vector<8x128xf32> -> vector<8x128xf32>
    %27 = arith.addf %25, %26 : vector<8x128xf32>
    %28 = math.tanh %27 : vector<8x128xf32>
    %29 = vector.broadcast %17 : vector<1x128xf32> to vector<8x128xf32>
    %30 = arith.mulf %28, %29 : vector<8x128xf32>
    %31 = vector.broadcast %20 : vector<1x128xf32> to vector<8x128xf32>
    %32 = arith.addf %30, %31 : vector<8x128xf32>
    %33 = vector.extract_strided_slice %32 {offsets = [0, 32], sizes = [8, 32], strides = [1, 1]} : vector<8x128xf32> to vector<8x32xf32>
    %34 = arith.mulf %33, %22 : vector<8x32xf32>
    %35 = vector.extract_strided_slice %32 {offsets = [0, 0], sizes = [8, 32], strides = [1, 1]} : vector<8x128xf32> to vector<8x32xf32>
    %36 = vector.extract_strided_slice %32 {offsets = [0, 96], sizes = [8, 32], strides = [1, 1]} : vector<8x128xf32> to vector<8x32xf32>
    %37 = arith.mulf %35, %36 : vector<8x32xf32>
    %38 = arith.addf %34, %37 : vector<8x32xf32>
    %39 = vector.extract_strided_slice %32 {offsets = [0, 64], sizes = [8, 32], strides = [1, 1]} : vector<8x128xf32> to vector<8x32xf32>
    %40 = math.tanh %38 : vector<8x32xf32>
    %41 = arith.mulf %39, %40 : vector<8x32xf32>
    %cst_19 = arith.constant dense<0.000000e+00> : vector<8x128xf32>
    %42 = tpu.matmul %41, %3, %cst_19 {dimension_numbers = #tpu.dot_dimension_numbers<[1], [0], [0], [1], [0, 0, 1, 1], [], []>} : vector<8x32xf32>, vector<32x128xf32>, vector<8x128xf32> -> vector<8x128xf32>
    %cst_20 = arith.constant dense<0.000000e+00> : vector<8x128xf32>
    %43 = tpu.matmul %23, %4, %cst_20 {dimension_numbers = #tpu.dot_dimension_numbers<[1], [0], [0], [1], [0, 0, 1, 1], [], []>} : vector<8x32xf32>, vector<32x128xf32>, vector<8x128xf32> -> vector<8x128xf32>
    %44 = arith.addf %42, %43 : vector<8x128xf32>
    %45 = vector.broadcast %5 : vector<1x128xf32> to vector<8x128xf32>
    %46 = arith.addf %44, %45 : vector<8x128xf32>
    %47 = math.tanh %46 : vector<8x128xf32>
    %48 = vector.broadcast %17 : vector<1x128xf32> to vector<8x128xf32>
    %49 = arith.mulf %47, %48 : vector<8x128xf32>
    %50 = vector.broadcast %20 : vector<1x128xf32> to vector<8x128xf32>
    %51 = arith.addf %49, %50 : vector<8x128xf32>
    %52 = vector.extract_strided_slice %51 {offsets = [0, 32], sizes = [8, 32], strides = [1, 1]} : vector<8x128xf32> to vector<8x32xf32>
    %53 = arith.mulf %52, %24 : vector<8x32xf32>
    %54 = vector.extract_strided_slice %51 {offsets = [0, 0], sizes = [8, 32], strides = [1, 1]} : vector<8x128xf32> to vector<8x32xf32>
    %55 = vector.extract_strided_slice %51 {offsets = [0, 96], sizes = [8, 32], strides = [1, 1]} : vector<8x128xf32> to vector<8x32xf32>
    %56 = arith.mulf %54, %55 : vector<8x32xf32>
    %57 = arith.addf %53, %56 : vector<8x32xf32>
    %58 = vector.extract_strided_slice %51 {offsets = [0, 64], sizes = [8, 32], strides = [1, 1]} : vector<8x128xf32> to vector<8x32xf32>
    %59 = math.tanh %57 : vector<8x32xf32>
    %60 = arith.mulf %58, %59 : vector<8x32xf32>
    %61 = vector.extract_strided_slice %11 {offsets = [8, 0], sizes = [8, 128], strides = [1, 1]} : vector<64x128xf32> to vector<8x128xf32>
    %cst_21 = arith.constant dense<0.000000e+00> : vector<8x128xf32>
    %62 = tpu.matmul %41, %1, %cst_21 {dimension_numbers = #tpu.dot_dimension_numbers<[1], [0], [0], [1], [0, 0, 1, 1], [], []>} : vector<8x32xf32>, vector<32x128xf32>, vector<8x128xf32> -> vector<8x128xf32>
    %63 = arith.addf %61, %62 : vector<8x128xf32>
    %64 = math.tanh %63 : vector<8x128xf32>
    %65 = vector.broadcast %17 : vector<1x128xf32> to vector<8x128xf32>
    %66 = arith.mulf %64, %65 : vector<8x128xf32>
    %67 = vector.broadcast %20 : vector<1x128xf32> to vector<8x128xf32>
    %68 = arith.addf %66, %67 : vector<8x128xf32>
    %69 = vector.extract_strided_slice %68 {offsets = [0, 32], sizes = [8, 32], strides = [1, 1]} : vector<8x128xf32> to vector<8x32xf32>
    %70 = arith.mulf %69, %38 : vector<8x32xf32>
    %71 = vector.extract_strided_slice %68 {offsets = [0, 0], sizes = [8, 32], strides = [1, 1]} : vector<8x128xf32> to vector<8x32xf32>
    %72 = vector.extract_strided_slice %68 {offsets = [0, 96], sizes = [8, 32], strides = [1, 1]} : vector<8x128xf32> to vector<8x32xf32>
    %73 = arith.mulf %71, %72 : vector<8x32xf32>
    %74 = arith.addf %70, %73 : vector<8x32xf32>
    %75 = vector.extract_strided_slice %68 {offsets = [0, 64], sizes = [8, 32], strides = [1, 1]} : vector<8x128xf32> to vector<8x32xf32>
    %76 = math.tanh %74 : vector<8x32xf32>
    %77 = arith.mulf %75, %76 : vector<8x32xf32>
    %cst_22 = arith.constant dense<0.000000e+00> : vector<8x128xf32>
    %78 = tpu.matmul %77, %3, %cst_22 {dimension_numbers = #tpu.dot_dimension_numbers<[1], [0], [0], [1], [0, 0, 1, 1], [], []>} : vector<8x32xf32>, vector<32x128xf32>, vector<8x128xf32> -> vector<8x128xf32>
    %cst_23 = arith.constant dense<0.000000e+00> : vector<8x128xf32>
    %79 = tpu.matmul %60, %4, %cst_23 {dimension_numbers = #tpu.dot_dimension_numbers<[1], [0], [0], [1], [0, 0, 1, 1], [], []>} : vector<8x32xf32>, vector<32x128xf32>, vector<8x128xf32> -> vector<8x128xf32>
    %80 = arith.addf %78, %79 : vector<8x128xf32>
    %81 = vector.broadcast %5 : vector<1x128xf32> to vector<8x128xf32>
    %82 = arith.addf %80, %81 : vector<8x128xf32>
    %83 = math.tanh %82 : vector<8x128xf32>
    %84 = vector.broadcast %17 : vector<1x128xf32> to vector<8x128xf32>
    %85 = arith.mulf %83, %84 : vector<8x128xf32>
    %86 = vector.broadcast %20 : vector<1x128xf32> to vector<8x128xf32>
    %87 = arith.addf %85, %86 : vector<8x128xf32>
    %88 = vector.extract_strided_slice %87 {offsets = [0, 32], sizes = [8, 32], strides = [1, 1]} : vector<8x128xf32> to vector<8x32xf32>
    %89 = arith.mulf %88, %57 : vector<8x32xf32>
    %90 = vector.extract_strided_slice %87 {offsets = [0, 0], sizes = [8, 32], strides = [1, 1]} : vector<8x128xf32> to vector<8x32xf32>
    %91 = vector.extract_strided_slice %87 {offsets = [0, 96], sizes = [8, 32], strides = [1, 1]} : vector<8x128xf32> to vector<8x32xf32>
    %92 = arith.mulf %90, %91 : vector<8x32xf32>
    %93 = arith.addf %89, %92 : vector<8x32xf32>
    %94 = vector.extract_strided_slice %87 {offsets = [0, 64], sizes = [8, 32], strides = [1, 1]} : vector<8x128xf32> to vector<8x32xf32>
    %95 = math.tanh %93 : vector<8x32xf32>
    %96 = arith.mulf %94, %95 : vector<8x32xf32>
    %97 = vector.extract_strided_slice %11 {offsets = [16, 0], sizes = [8, 128], strides = [1, 1]} : vector<64x128xf32> to vector<8x128xf32>
    %cst_24 = arith.constant dense<0.000000e+00> : vector<8x128xf32>
    %98 = tpu.matmul %77, %1, %cst_24 {dimension_numbers = #tpu.dot_dimension_numbers<[1], [0], [0], [1], [0, 0, 1, 1], [], []>} : vector<8x32xf32>, vector<32x128xf32>, vector<8x128xf32> -> vector<8x128xf32>
    %99 = arith.addf %97, %98 : vector<8x128xf32>
    %100 = math.tanh %99 : vector<8x128xf32>
    %101 = vector.broadcast %17 : vector<1x128xf32> to vector<8x128xf32>
    %102 = arith.mulf %100, %101 : vector<8x128xf32>
    %103 = vector.broadcast %20 : vector<1x128xf32> to vector<8x128xf32>
    %104 = arith.addf %102, %103 : vector<8x128xf32>
    %105 = vector.extract_strided_slice %104 {offsets = [0, 32], sizes = [8, 32], strides = [1, 1]} : vector<8x128xf32> to vector<8x32xf32>
    %106 = arith.mulf %105, %74 : vector<8x32xf32>
    %107 = vector.extract_strided_slice %104 {offsets = [0, 0], sizes = [8, 32], strides = [1, 1]} : vector<8x128xf32> to vector<8x32xf32>
    %108 = vector.extract_strided_slice %104 {offsets = [0, 96], sizes = [8, 32], strides = [1, 1]} : vector<8x128xf32> to vector<8x32xf32>
    %109 = arith.mulf %107, %108 : vector<8x32xf32>
    %110 = arith.addf %106, %109 : vector<8x32xf32>
    %111 = vector.extract_strided_slice %104 {offsets = [0, 64], sizes = [8, 32], strides = [1, 1]} : vector<8x128xf32> to vector<8x32xf32>
    %112 = math.tanh %110 : vector<8x32xf32>
    %113 = arith.mulf %111, %112 : vector<8x32xf32>
    %cst_25 = arith.constant dense<0.000000e+00> : vector<8x128xf32>
    %114 = tpu.matmul %113, %3, %cst_25 {dimension_numbers = #tpu.dot_dimension_numbers<[1], [0], [0], [1], [0, 0, 1, 1], [], []>} : vector<8x32xf32>, vector<32x128xf32>, vector<8x128xf32> -> vector<8x128xf32>
    %cst_26 = arith.constant dense<0.000000e+00> : vector<8x128xf32>
    %115 = tpu.matmul %96, %4, %cst_26 {dimension_numbers = #tpu.dot_dimension_numbers<[1], [0], [0], [1], [0, 0, 1, 1], [], []>} : vector<8x32xf32>, vector<32x128xf32>, vector<8x128xf32> -> vector<8x128xf32>
    %116 = arith.addf %114, %115 : vector<8x128xf32>
    %117 = vector.broadcast %5 : vector<1x128xf32> to vector<8x128xf32>
    %118 = arith.addf %116, %117 : vector<8x128xf32>
    %119 = math.tanh %118 : vector<8x128xf32>
    %120 = vector.broadcast %17 : vector<1x128xf32> to vector<8x128xf32>
    %121 = arith.mulf %119, %120 : vector<8x128xf32>
    %122 = vector.broadcast %20 : vector<1x128xf32> to vector<8x128xf32>
    %123 = arith.addf %121, %122 : vector<8x128xf32>
    %124 = vector.extract_strided_slice %123 {offsets = [0, 32], sizes = [8, 32], strides = [1, 1]} : vector<8x128xf32> to vector<8x32xf32>
    %125 = arith.mulf %124, %93 : vector<8x32xf32>
    %126 = vector.extract_strided_slice %123 {offsets = [0, 0], sizes = [8, 32], strides = [1, 1]} : vector<8x128xf32> to vector<8x32xf32>
    %127 = vector.extract_strided_slice %123 {offsets = [0, 96], sizes = [8, 32], strides = [1, 1]} : vector<8x128xf32> to vector<8x32xf32>
    %128 = arith.mulf %126, %127 : vector<8x32xf32>
    %129 = arith.addf %125, %128 : vector<8x32xf32>
    %130 = vector.extract_strided_slice %123 {offsets = [0, 64], sizes = [8, 32], strides = [1, 1]} : vector<8x128xf32> to vector<8x32xf32>
    %131 = math.tanh %129 : vector<8x32xf32>
    %132 = arith.mulf %130, %131 : vector<8x32xf32>
    %133 = vector.extract_strided_slice %11 {offsets = [24, 0], sizes = [8, 128], strides = [1, 1]} : vector<64x128xf32> to vector<8x128xf32>
    %cst_27 = arith.constant dense<0.000000e+00> : vector<8x128xf32>
    %134 = tpu.matmul %113, %1, %cst_27 {dimension_numbers = #tpu.dot_dimension_numbers<[1], [0], [0], [1], [0, 0, 1, 1], [], []>} : vector<8x32xf32>, vector<32x128xf32>, vector<8x128xf32> -> vector<8x128xf32>
    %135 = arith.addf %133, %134 : vector<8x128xf32>
    %136 = math.tanh %135 : vector<8x128xf32>
    %137 = vector.broadcast %17 : vector<1x128xf32> to vector<8x128xf32>
    %138 = arith.mulf %136, %137 : vector<8x128xf32>
    %139 = vector.broadcast %20 : vector<1x128xf32> to vector<8x128xf32>
    %140 = arith.addf %138, %139 : vector<8x128xf32>
    %141 = vector.extract_strided_slice %140 {offsets = [0, 32], sizes = [8, 32], strides = [1, 1]} : vector<8x128xf32> to vector<8x32xf32>
    %142 = arith.mulf %141, %110 : vector<8x32xf32>
    %143 = vector.extract_strided_slice %140 {offsets = [0, 0], sizes = [8, 32], strides = [1, 1]} : vector<8x128xf32> to vector<8x32xf32>
    %144 = vector.extract_strided_slice %140 {offsets = [0, 96], sizes = [8, 32], strides = [1, 1]} : vector<8x128xf32> to vector<8x32xf32>
    %145 = arith.mulf %143, %144 : vector<8x32xf32>
    %146 = arith.addf %142, %145 : vector<8x32xf32>
    %147 = vector.extract_strided_slice %140 {offsets = [0, 64], sizes = [8, 32], strides = [1, 1]} : vector<8x128xf32> to vector<8x32xf32>
    %148 = math.tanh %146 : vector<8x32xf32>
    %149 = arith.mulf %147, %148 : vector<8x32xf32>
    %cst_28 = arith.constant dense<0.000000e+00> : vector<8x128xf32>
    %150 = tpu.matmul %149, %3, %cst_28 {dimension_numbers = #tpu.dot_dimension_numbers<[1], [0], [0], [1], [0, 0, 1, 1], [], []>} : vector<8x32xf32>, vector<32x128xf32>, vector<8x128xf32> -> vector<8x128xf32>
    %cst_29 = arith.constant dense<0.000000e+00> : vector<8x128xf32>
    %151 = tpu.matmul %132, %4, %cst_29 {dimension_numbers = #tpu.dot_dimension_numbers<[1], [0], [0], [1], [0, 0, 1, 1], [], []>} : vector<8x32xf32>, vector<32x128xf32>, vector<8x128xf32> -> vector<8x128xf32>
    %152 = arith.addf %150, %151 : vector<8x128xf32>
    %153 = vector.broadcast %5 : vector<1x128xf32> to vector<8x128xf32>
    %154 = arith.addf %152, %153 : vector<8x128xf32>
    %155 = math.tanh %154 : vector<8x128xf32>
    %156 = vector.broadcast %17 : vector<1x128xf32> to vector<8x128xf32>
    %157 = arith.mulf %155, %156 : vector<8x128xf32>
    %158 = vector.broadcast %20 : vector<1x128xf32> to vector<8x128xf32>
    %159 = arith.addf %157, %158 : vector<8x128xf32>
    %160 = vector.extract_strided_slice %159 {offsets = [0, 32], sizes = [8, 32], strides = [1, 1]} : vector<8x128xf32> to vector<8x32xf32>
    %161 = arith.mulf %160, %129 : vector<8x32xf32>
    %162 = vector.extract_strided_slice %159 {offsets = [0, 0], sizes = [8, 32], strides = [1, 1]} : vector<8x128xf32> to vector<8x32xf32>
    %163 = vector.extract_strided_slice %159 {offsets = [0, 96], sizes = [8, 32], strides = [1, 1]} : vector<8x128xf32> to vector<8x32xf32>
    %164 = arith.mulf %162, %163 : vector<8x32xf32>
    %165 = arith.addf %161, %164 : vector<8x32xf32>
    %166 = vector.extract_strided_slice %159 {offsets = [0, 64], sizes = [8, 32], strides = [1, 1]} : vector<8x128xf32> to vector<8x32xf32>
    %167 = math.tanh %165 : vector<8x32xf32>
    %168 = arith.mulf %166, %167 : vector<8x32xf32>
    %169 = vector.extract_strided_slice %11 {offsets = [32, 0], sizes = [8, 128], strides = [1, 1]} : vector<64x128xf32> to vector<8x128xf32>
    %cst_30 = arith.constant dense<0.000000e+00> : vector<8x128xf32>
    %170 = tpu.matmul %149, %1, %cst_30 {dimension_numbers = #tpu.dot_dimension_numbers<[1], [0], [0], [1], [0, 0, 1, 1], [], []>} : vector<8x32xf32>, vector<32x128xf32>, vector<8x128xf32> -> vector<8x128xf32>
    %171 = arith.addf %169, %170 : vector<8x128xf32>
    %172 = math.tanh %171 : vector<8x128xf32>
    %173 = vector.broadcast %17 : vector<1x128xf32> to vector<8x128xf32>
    %174 = arith.mulf %172, %173 : vector<8x128xf32>
    %175 = vector.broadcast %20 : vector<1x128xf32> to vector<8x128xf32>
    %176 = arith.addf %174, %175 : vector<8x128xf32>
    %177 = vector.extract_strided_slice %176 {offsets = [0, 32], sizes = [8, 32], strides = [1, 1]} : vector<8x128xf32> to vector<8x32xf32>
    %178 = arith.mulf %177, %146 : vector<8x32xf32>
    %179 = vector.extract_strided_slice %176 {offsets = [0, 0], sizes = [8, 32], strides = [1, 1]} : vector<8x128xf32> to vector<8x32xf32>
    %180 = vector.extract_strided_slice %176 {offsets = [0, 96], sizes = [8, 32], strides = [1, 1]} : vector<8x128xf32> to vector<8x32xf32>
    %181 = arith.mulf %179, %180 : vector<8x32xf32>
    %182 = arith.addf %178, %181 : vector<8x32xf32>
    %183 = vector.extract_strided_slice %176 {offsets = [0, 64], sizes = [8, 32], strides = [1, 1]} : vector<8x128xf32> to vector<8x32xf32>
    %184 = math.tanh %182 : vector<8x32xf32>
    %185 = arith.mulf %183, %184 : vector<8x32xf32>
    %cst_31 = arith.constant dense<0.000000e+00> : vector<8x128xf32>
    %186 = tpu.matmul %185, %3, %cst_31 {dimension_numbers = #tpu.dot_dimension_numbers<[1], [0], [0], [1], [0, 0, 1, 1], [], []>} : vector<8x32xf32>, vector<32x128xf32>, vector<8x128xf32> -> vector<8x128xf32>
    %cst_32 = arith.constant dense<0.000000e+00> : vector<8x128xf32>
    %187 = tpu.matmul %168, %4, %cst_32 {dimension_numbers = #tpu.dot_dimension_numbers<[1], [0], [0], [1], [0, 0, 1, 1], [], []>} : vector<8x32xf32>, vector<32x128xf32>, vector<8x128xf32> -> vector<8x128xf32>
    %188 = arith.addf %186, %187 : vector<8x128xf32>
    %189 = vector.broadcast %5 : vector<1x128xf32> to vector<8x128xf32>
    %190 = arith.addf %188, %189 : vector<8x128xf32>
    %191 = math.tanh %190 : vector<8x128xf32>
    %192 = vector.broadcast %17 : vector<1x128xf32> to vector<8x128xf32>
    %193 = arith.mulf %191, %192 : vector<8x128xf32>
    %194 = vector.broadcast %20 : vector<1x128xf32> to vector<8x128xf32>
    %195 = arith.addf %193, %194 : vector<8x128xf32>
    %196 = vector.extract_strided_slice %195 {offsets = [0, 32], sizes = [8, 32], strides = [1, 1]} : vector<8x128xf32> to vector<8x32xf32>
    %197 = arith.mulf %196, %165 : vector<8x32xf32>
    %198 = vector.extract_strided_slice %195 {offsets = [0, 0], sizes = [8, 32], strides = [1, 1]} : vector<8x128xf32> to vector<8x32xf32>
    %199 = vector.extract_strided_slice %195 {offsets = [0, 96], sizes = [8, 32], strides = [1, 1]} : vector<8x128xf32> to vector<8x32xf32>
    %200 = arith.mulf %198, %199 : vector<8x32xf32>
    %201 = arith.addf %197, %200 : vector<8x32xf32>
    %202 = vector.extract_strided_slice %195 {offsets = [0, 64], sizes = [8, 32], strides = [1, 1]} : vector<8x128xf32> to vector<8x32xf32>
    %203 = math.tanh %201 : vector<8x32xf32>
    %204 = arith.mulf %202, %203 : vector<8x32xf32>
    %205 = vector.extract_strided_slice %11 {offsets = [40, 0], sizes = [8, 128], strides = [1, 1]} : vector<64x128xf32> to vector<8x128xf32>
    %cst_33 = arith.constant dense<0.000000e+00> : vector<8x128xf32>
    %206 = tpu.matmul %185, %1, %cst_33 {dimension_numbers = #tpu.dot_dimension_numbers<[1], [0], [0], [1], [0, 0, 1, 1], [], []>} : vector<8x32xf32>, vector<32x128xf32>, vector<8x128xf32> -> vector<8x128xf32>
    %207 = arith.addf %205, %206 : vector<8x128xf32>
    %208 = math.tanh %207 : vector<8x128xf32>
    %209 = vector.broadcast %17 : vector<1x128xf32> to vector<8x128xf32>
    %210 = arith.mulf %208, %209 : vector<8x128xf32>
    %211 = vector.broadcast %20 : vector<1x128xf32> to vector<8x128xf32>
    %212 = arith.addf %210, %211 : vector<8x128xf32>
    %213 = vector.extract_strided_slice %212 {offsets = [0, 32], sizes = [8, 32], strides = [1, 1]} : vector<8x128xf32> to vector<8x32xf32>
    %214 = arith.mulf %213, %182 : vector<8x32xf32>
    %215 = vector.extract_strided_slice %212 {offsets = [0, 0], sizes = [8, 32], strides = [1, 1]} : vector<8x128xf32> to vector<8x32xf32>
    %216 = vector.extract_strided_slice %212 {offsets = [0, 96], sizes = [8, 32], strides = [1, 1]} : vector<8x128xf32> to vector<8x32xf32>
    %217 = arith.mulf %215, %216 : vector<8x32xf32>
    %218 = arith.addf %214, %217 : vector<8x32xf32>
    %219 = vector.extract_strided_slice %212 {offsets = [0, 64], sizes = [8, 32], strides = [1, 1]} : vector<8x128xf32> to vector<8x32xf32>
    %220 = math.tanh %218 : vector<8x32xf32>
    %221 = arith.mulf %219, %220 : vector<8x32xf32>
    %cst_34 = arith.constant dense<0.000000e+00> : vector<8x128xf32>
    %222 = tpu.matmul %221, %3, %cst_34 {dimension_numbers = #tpu.dot_dimension_numbers<[1], [0], [0], [1], [0, 0, 1, 1], [], []>} : vector<8x32xf32>, vector<32x128xf32>, vector<8x128xf32> -> vector<8x128xf32>
    %cst_35 = arith.constant dense<0.000000e+00> : vector<8x128xf32>
    %223 = tpu.matmul %204, %4, %cst_35 {dimension_numbers = #tpu.dot_dimension_numbers<[1], [0], [0], [1], [0, 0, 1, 1], [], []>} : vector<8x32xf32>, vector<32x128xf32>, vector<8x128xf32> -> vector<8x128xf32>
    %224 = arith.addf %222, %223 : vector<8x128xf32>
    %225 = vector.broadcast %5 : vector<1x128xf32> to vector<8x128xf32>
    %226 = arith.addf %224, %225 : vector<8x128xf32>
    %227 = math.tanh %226 : vector<8x128xf32>
    %228 = vector.broadcast %17 : vector<1x128xf32> to vector<8x128xf32>
    %229 = arith.mulf %227, %228 : vector<8x128xf32>
    %230 = vector.broadcast %20 : vector<1x128xf32> to vector<8x128xf32>
    %231 = arith.addf %229, %230 : vector<8x128xf32>
    %232 = vector.extract_strided_slice %231 {offsets = [0, 32], sizes = [8, 32], strides = [1, 1]} : vector<8x128xf32> to vector<8x32xf32>
    %233 = arith.mulf %232, %201 : vector<8x32xf32>
    %234 = vector.extract_strided_slice %231 {offsets = [0, 0], sizes = [8, 32], strides = [1, 1]} : vector<8x128xf32> to vector<8x32xf32>
    %235 = vector.extract_strided_slice %231 {offsets = [0, 96], sizes = [8, 32], strides = [1, 1]} : vector<8x128xf32> to vector<8x32xf32>
    %236 = arith.mulf %234, %235 : vector<8x32xf32>
    %237 = arith.addf %233, %236 : vector<8x32xf32>
    %238 = vector.extract_strided_slice %231 {offsets = [0, 64], sizes = [8, 32], strides = [1, 1]} : vector<8x128xf32> to vector<8x32xf32>
    %239 = math.tanh %237 : vector<8x32xf32>
    %240 = arith.mulf %238, %239 : vector<8x32xf32>
    %241 = vector.extract_strided_slice %11 {offsets = [48, 0], sizes = [8, 128], strides = [1, 1]} : vector<64x128xf32> to vector<8x128xf32>
    %cst_36 = arith.constant dense<0.000000e+00> : vector<8x128xf32>
    %242 = tpu.matmul %221, %1, %cst_36 {dimension_numbers = #tpu.dot_dimension_numbers<[1], [0], [0], [1], [0, 0, 1, 1], [], []>} : vector<8x32xf32>, vector<32x128xf32>, vector<8x128xf32> -> vector<8x128xf32>
    %243 = arith.addf %241, %242 : vector<8x128xf32>
    %244 = math.tanh %243 : vector<8x128xf32>
    %245 = vector.broadcast %17 : vector<1x128xf32> to vector<8x128xf32>
    %246 = arith.mulf %244, %245 : vector<8x128xf32>
    %247 = vector.broadcast %20 : vector<1x128xf32> to vector<8x128xf32>
    %248 = arith.addf %246, %247 : vector<8x128xf32>
    %249 = vector.extract_strided_slice %248 {offsets = [0, 32], sizes = [8, 32], strides = [1, 1]} : vector<8x128xf32> to vector<8x32xf32>
    %250 = arith.mulf %249, %218 : vector<8x32xf32>
    %251 = vector.extract_strided_slice %248 {offsets = [0, 0], sizes = [8, 32], strides = [1, 1]} : vector<8x128xf32> to vector<8x32xf32>
    %252 = vector.extract_strided_slice %248 {offsets = [0, 96], sizes = [8, 32], strides = [1, 1]} : vector<8x128xf32> to vector<8x32xf32>
    %253 = arith.mulf %251, %252 : vector<8x32xf32>
    %254 = arith.addf %250, %253 : vector<8x32xf32>
    %255 = vector.extract_strided_slice %248 {offsets = [0, 64], sizes = [8, 32], strides = [1, 1]} : vector<8x128xf32> to vector<8x32xf32>
    %256 = math.tanh %254 : vector<8x32xf32>
    %257 = arith.mulf %255, %256 : vector<8x32xf32>
    %cst_37 = arith.constant dense<0.000000e+00> : vector<8x128xf32>
    %258 = tpu.matmul %257, %3, %cst_37 {dimension_numbers = #tpu.dot_dimension_numbers<[1], [0], [0], [1], [0, 0, 1, 1], [], []>} : vector<8x32xf32>, vector<32x128xf32>, vector<8x128xf32> -> vector<8x128xf32>
    %cst_38 = arith.constant dense<0.000000e+00> : vector<8x128xf32>
    %259 = tpu.matmul %240, %4, %cst_38 {dimension_numbers = #tpu.dot_dimension_numbers<[1], [0], [0], [1], [0, 0, 1, 1], [], []>} : vector<8x32xf32>, vector<32x128xf32>, vector<8x128xf32> -> vector<8x128xf32>
    %260 = arith.addf %258, %259 : vector<8x128xf32>
    %261 = vector.broadcast %5 : vector<1x128xf32> to vector<8x128xf32>
    %262 = arith.addf %260, %261 : vector<8x128xf32>
    %263 = math.tanh %262 : vector<8x128xf32>
    %264 = vector.broadcast %17 : vector<1x128xf32> to vector<8x128xf32>
    %265 = arith.mulf %263, %264 : vector<8x128xf32>
    %266 = vector.broadcast %20 : vector<1x128xf32> to vector<8x128xf32>
    %267 = arith.addf %265, %266 : vector<8x128xf32>
    %268 = vector.extract_strided_slice %267 {offsets = [0, 32], sizes = [8, 32], strides = [1, 1]} : vector<8x128xf32> to vector<8x32xf32>
    %269 = arith.mulf %268, %237 : vector<8x32xf32>
    %270 = vector.extract_strided_slice %267 {offsets = [0, 0], sizes = [8, 32], strides = [1, 1]} : vector<8x128xf32> to vector<8x32xf32>
    %271 = vector.extract_strided_slice %267 {offsets = [0, 96], sizes = [8, 32], strides = [1, 1]} : vector<8x128xf32> to vector<8x32xf32>
    %272 = arith.mulf %270, %271 : vector<8x32xf32>
    %273 = arith.addf %269, %272 : vector<8x32xf32>
    %274 = vector.extract_strided_slice %267 {offsets = [0, 64], sizes = [8, 32], strides = [1, 1]} : vector<8x128xf32> to vector<8x32xf32>
    %275 = math.tanh %273 : vector<8x32xf32>
    %276 = arith.mulf %274, %275 : vector<8x32xf32>
    %277 = vector.extract_strided_slice %11 {offsets = [56, 0], sizes = [8, 128], strides = [1, 1]} : vector<64x128xf32> to vector<8x128xf32>
    %cst_39 = arith.constant dense<0.000000e+00> : vector<8x128xf32>
    %278 = tpu.matmul %257, %1, %cst_39 {dimension_numbers = #tpu.dot_dimension_numbers<[1], [0], [0], [1], [0, 0, 1, 1], [], []>} : vector<8x32xf32>, vector<32x128xf32>, vector<8x128xf32> -> vector<8x128xf32>
    %279 = arith.addf %277, %278 : vector<8x128xf32>
    %280 = math.tanh %279 : vector<8x128xf32>
    %281 = vector.broadcast %17 : vector<1x128xf32> to vector<8x128xf32>
    %282 = arith.mulf %280, %281 : vector<8x128xf32>
    %283 = vector.broadcast %20 : vector<1x128xf32> to vector<8x128xf32>
    %284 = arith.addf %282, %283 : vector<8x128xf32>
    %285 = vector.extract_strided_slice %284 {offsets = [0, 32], sizes = [8, 32], strides = [1, 1]} : vector<8x128xf32> to vector<8x32xf32>
    %286 = arith.mulf %285, %254 : vector<8x32xf32>
    %287 = vector.extract_strided_slice %284 {offsets = [0, 0], sizes = [8, 32], strides = [1, 1]} : vector<8x128xf32> to vector<8x32xf32>
    %288 = vector.extract_strided_slice %284 {offsets = [0, 96], sizes = [8, 32], strides = [1, 1]} : vector<8x128xf32> to vector<8x32xf32>
    %289 = arith.mulf %287, %288 : vector<8x32xf32>
    %290 = arith.addf %286, %289 : vector<8x32xf32>
    %291 = vector.extract_strided_slice %284 {offsets = [0, 64], sizes = [8, 32], strides = [1, 1]} : vector<8x128xf32> to vector<8x32xf32>
    %292 = math.tanh %290 : vector<8x32xf32>
    %293 = arith.mulf %291, %292 : vector<8x32xf32>
    %cst_40 = arith.constant dense<0.000000e+00> : vector<8x128xf32>
    %294 = tpu.matmul %293, %3, %cst_40 {dimension_numbers = #tpu.dot_dimension_numbers<[1], [0], [0], [1], [0, 0, 1, 1], [], []>} : vector<8x32xf32>, vector<32x128xf32>, vector<8x128xf32> -> vector<8x128xf32>
    %cst_41 = arith.constant dense<0.000000e+00> : vector<8x128xf32>
    %295 = tpu.matmul %276, %4, %cst_41 {dimension_numbers = #tpu.dot_dimension_numbers<[1], [0], [0], [1], [0, 0, 1, 1], [], []>} : vector<8x32xf32>, vector<32x128xf32>, vector<8x128xf32> -> vector<8x128xf32>
    %296 = arith.addf %294, %295 : vector<8x128xf32>
    %297 = vector.broadcast %5 : vector<1x128xf32> to vector<8x128xf32>
    %298 = arith.addf %296, %297 : vector<8x128xf32>
    %299 = math.tanh %298 : vector<8x128xf32>
    %300 = vector.broadcast %17 : vector<1x128xf32> to vector<8x128xf32>
    %301 = arith.mulf %299, %300 : vector<8x128xf32>
    %302 = vector.broadcast %20 : vector<1x128xf32> to vector<8x128xf32>
    %303 = arith.addf %301, %302 : vector<8x128xf32>
    %304 = vector.extract_strided_slice %303 {offsets = [0, 32], sizes = [8, 32], strides = [1, 1]} : vector<8x128xf32> to vector<8x32xf32>
    %305 = arith.mulf %304, %273 : vector<8x32xf32>
    %306 = vector.extract_strided_slice %303 {offsets = [0, 0], sizes = [8, 32], strides = [1, 1]} : vector<8x128xf32> to vector<8x32xf32>
    %307 = vector.extract_strided_slice %303 {offsets = [0, 96], sizes = [8, 32], strides = [1, 1]} : vector<8x128xf32> to vector<8x32xf32>
    %308 = arith.mulf %306, %307 : vector<8x32xf32>
    %309 = arith.addf %305, %308 : vector<8x32xf32>
    %310 = vector.extract_strided_slice %303 {offsets = [0, 64], sizes = [8, 32], strides = [1, 1]} : vector<8x128xf32> to vector<8x32xf32>
    %311 = math.tanh %309 : vector<8x32xf32>
    %312 = arith.mulf %310, %311 : vector<8x32xf32>
    %cst_42 = arith.constant dense<0.000000e+00> : vector<8x128xf32>
    %313 = tpu.matmul %312, %6, %cst_42 {dimension_numbers = #tpu.dot_dimension_numbers<[1], [0], [0], [1], [0, 0, 1, 1], [], []>} : vector<8x32xf32>, vector<32x128xf32>, vector<8x128xf32> -> vector<8x128xf32>
    %314 = vector.broadcast %7 : vector<1x128xf32> to vector<8x128xf32>
    %315 = arith.addf %313, %314 : vector<8x128xf32>
    %c0_43 = arith.constant 0 : index
    %c0_44 = arith.constant 0 : index
    %316 = vector.load %arg2[%c0_43, %c0_44] : memref<8x128xf32, #tpu.memory_space<vmem>>, vector<8x128xf32>
    tpu.vector_store %arg2[%c0_43, %c0_44], %315 {strides = array<i32>} : memref<8x128xf32, #tpu.memory_space<vmem>>, vector<8x128xf32>,
    return
  }
}

</mosaic_0001>

<llo_original>
// kernel: tpu_custom_call.1
$region0: #{tpu_custom_call.1}
  #allocation0 [shape = 'u32[]', space=smem, size = 0x4, offset = 0x4, fixed_abs, tag = 'smem constant byte address 0x4 - core index']
  #allocation1 [shape = 'u32[144,128]{1,0:T(1,128)}', space=vmem, size = 0x12000, scoped, tag = 'internal scratch']
  %s0 = inlined_call_operand.vmem [shape: f32[64,8], index: 0, kind: input, shape index: {}]
  %s1 = inlined_call_operand.hbm [shape: f32[160,128], index: 1, kind: input, shape index: {}]
  %s2 = inlined_call_operand.hbm [shape: f32[8,128], index: 2, kind: output, shape index: {}]
  %s3 = sld [smem:[#allocation0]]
  $region22: #{tpu_custom_call.1} parent=0
    _
  %s5 = ssub.s32 1, %s3
  %s6 = scalar_select 0, %s5, %s3
  $region1: #{tpu_custom_call.1} parent=0
    #allocation2 [shape = 'u8[81920]{0}', space=vmem, size = 0x14000, scoped, tag = 'input window, operand 1, single buffered']
    #allocation3 [shape = 's32[1]{0}', space=sflag, size = 0x4, scoped, tag = 'scoped memory for tpu_custom_call.1']
    #allocation4 [shape = 's32[1]{0}', space=sflag, size = 0x4, scoped, tag = 'scoped memory for tpu_custom_call.1']
    #allocation5 [shape = 'u8[4096]{0}', space=vmem, size = 0x1000, scoped, tag = 'output window, operand 0, single buffered']
    %7 = vsyncpa [#allocation3], 0
    %8 = vsyncpa [#allocation4], 0
    // Predicated region
    $region2: #{tpu_custom_call.1} parent=1 // pred_check
      _
    $region3: #{tpu_custom_call.1} parent=1 // pred_check_branch
      %10 = sbr.rel (0) target = $region5
    $region4: #{tpu_custom_call.1} parent=1 // pred_region
      _
    $region5: #{tpu_custom_call.1} parent=1 // pred_fallthru
      _
    // Predicated region
    $region6: #{tpu_custom_call.1} parent=1 // pred_check
      _
    $region7: #{tpu_custom_call.1} parent=1 // pred_check_branch
      %12 = sbr.rel (0) target = $region9
    $region8: #{tpu_custom_call.1} parent=1 // pred_region
      %s14 = ssub.s32 2560, 2560
      %15 = vsyncadd [#allocation3], %s14
      %s16 = sshll.u32 [#allocation2], 4
      %s17 = int_to_ptr.vmem [resolvable:$true] %s16
      %22 = dma.hbm_to_vmem [thread:$0]  %s1, 2560, %s17, [#allocation3], 128, 128, 8
    $region9: #{tpu_custom_call.1} parent=1 // pred_fallthru
      _
    // Predicated region
    $region10: #{tpu_custom_call.1} parent=1 // pred_check
      _
    $region11: #{tpu_custom_call.1} parent=1 // pred_check_branch
      %24 = sbr.rel (0) target = $region13
    $region12: #{tpu_custom_call.1} parent=1 // pred_region
      %25 = dma.done [#allocation3], 2560
    $region13: #{tpu_custom_call.1} parent=1 // pred_fallthru
      _
    %v26 = vld [vmem:[#allocation2] sm:$0xff]
    %v27 = vld [vmem:[#allocation2 + $0x8] sm:$0xff]
    %v28 = vld [vmem:[#allocation2 + $0x10] sm:$0xff]
    %v29 = vld [vmem:[#allocation2 + $0x18] sm:$0xff]
    %v30 = vld [vmem:[#allocation2 + $0x20] sm:$0xff]
    %v31 = vld [vmem:[#allocation2 + $0x28] sm:$0x1]
    %v32 = vld [vmem:[#allocation2 + $0x30] sm:$0xff]
    %v33 = vld [vmem:[#allocation2 + $0x38] sm:$0xff]
    %v34 = vld [vmem:[#allocation2 + $0x40] sm:$0xff]
    %v35 = vld [vmem:[#allocation2 + $0x48] sm:$0xff]
    %v36 = vld [vmem:[#allocation2 + $0x50] sm:$0xff]
    %v37 = vld [vmem:[#allocation2 + $0x58] sm:$0xff]
    %v38 = vld [vmem:[#allocation2 + $0x60] sm:$0xff]
    %v39 = vld [vmem:[#allocation2 + $0x68] sm:$0xff]
    %v40 = vld [vmem:[#allocation2 + $0x70] sm:$0x1]
    %v41 = vld [vmem:[#allocation2 + $0x78] sm:$0xff]
    %v42 = vld [vmem:[#allocation2 + $0x80] sm:$0xff]
    %v43 = vld [vmem:[#allocation2 + $0x88] sm:$0xff]
    %v44 = vld [vmem:[#allocation2 + $0x90] sm:$0xff]
    %v45 = vld [vmem:[#allocation2 + $0x98] sm:$0x1]
    %v46 = vld [vmem:[%s0] sm:$0xff]
    %v47 = vld [vmem:[%s0 + $0x8] sm:$0xff]
    %v48 = vld [vmem:[%s0 + $0x10] sm:$0xff]
    %v49 = vld [vmem:[%s0 + $0x18] sm:$0xff]
    %v50 = vld [vmem:[%s0 + $0x20] sm:$0xff]
    %v51 = vld [vmem:[%s0 + $0x28] sm:$0xff]
    %v52 = vld [vmem:[%s0 + $0x30] sm:$0xff]
    %v53 = vld [vmem:[%s0 + $0x38] sm:$0xff]
    %v54 = vlaneseq
    %v55 = vshrl.u32 %v54, 7
    %v56 = vsub.s32 0, %v55
    %v57 = vrot.slane %v31, %v56
    %vm58 = vcmask 64512
    %v60 = vsel %vm58, %v46, 0
    %v63 = vsel %vm58, %v47, 0
    %v66 = vsel %vm58, %v48, 0
    %v69 = vsel %vm58, %v49, 0
    %v72 = vsel %vm58, %v50, 0
    %v75 = vsel %vm58, %v51, 0
    %v78 = vsel %vm58, %v52, 0
    %v81 = vsel %vm58, %v53, 0
    %83 = vmatprep.subr.mxu0 0.0
    %84 = vmatpush1.msra.mxu0 0.0
    %85 = vmatprep.subr.mxu0 0.0
    %86 = vmatpush1.msra.mxu0 0.0
    %87 = vmatprep.subr.mxu0 0.0
    %88 = vmatpush1.msra.mxu0 0.0
    %89 = vmatprep.subr.mxu0 0.0
    %90 = vmatpush1.msra.mxu0 0.0
    %91 = vmatprep.subr.mxu0 0.0
    %92 = vmatpush1.msra.mxu0 0.0
    %93 = vmatprep.subr.mxu0 0.0
    %94 = vmatpush1.msra.mxu0 0.0
    %95 = vmatprep.subr.mxu0 0.0
    %96 = vmatpush1.msra.mxu0 0.0
    %97 = vmatprep.subr.mxu0 0.0
    %98 = vmatpush1.msra.mxu0 0.0
    %99 = vmatprep.subr.mxu0 0.0
    %100 = vmatpush1.msra.mxu0 0.0
    %101 = vmatprep.subr.mxu0 0.0
    %102 = vmatpush1.msra.mxu0 0.0
    %103 = vmatprep.subr.mxu0 0.0
    %104 = vmatpush1.msra.mxu0 0.0
    %105 = vmatprep.subr.mxu0 0.0
    %106 = vmatpush1.msra.mxu0 0.0
    %107 = vmatprep.subr.mxu0 0.0
    %108 = vmatpush1.msra.mxu0 0.0
    %109 = vmatprep.subr.mxu0 0.0
    %110 = vmatpush1.msra.mxu0 0.0
    %111 = vmatprep.subr.mxu0 0.0
    %112 = vmatpush1.msra.mxu0 0.0
    %113 = vmatprep.subr.mxu0 0.0
    %114 = vmatpush1.msra.mxu0 %v26
    %115 = vmatprep.subr.mxu0 0.0
    %116 = vmatpush2.msra.mxu0 0.0
    %117 = vmatprep.subr.mxu0 0.0
    %118 = vmatpush2.msra.mxu0 0.0
    %119 = vmatprep.subr.mxu0 0.0
    %120 = vmatpush2.msra.mxu0 0.0
    %121 = vmatprep.subr.mxu0 0.0
    %122 = vmatpush2.msra.mxu0 0.0
    %123 = vmatprep.subr.mxu0 0.0
    %124 = vmatpush2.msra.mxu0 0.0
    %125 = vmatprep.subr.mxu0 0.0
    %126 = vmatpush2.msra.mxu0 0.0
    %127 = vmatprep.subr.mxu0 0.0
    %128 = vmatpush2.msra.mxu0 0.0
    %129 = vmatprep.subr.mxu0 0.0
    %130 = vmatpush2.msra.mxu0 0.0
    %131 = vmatprep.subr.mxu0 0.0
    %132 = vmatpush2.msra.mxu0 0.0
    %133 = vmatprep.subr.mxu0 0.0
    %134 = vmatpush2.msra.mxu0 0.0
    %135 = vmatprep.subr.mxu0 0.0
    %136 = vmatpush2.msra.mxu0 0.0
    %137 = vmatprep.subr.mxu0 0.0
    %138 = vmatpush2.msra.mxu0 0.0
    %139 = vmatprep.subr.mxu0 0.0
    %140 = vmatpush2.msra.mxu0 0.0
    %141 = vmatprep.subr.mxu0 0.0
    %142 = vmatpush2.msra.mxu0 0.0
    %143 = vmatprep.subr.mxu0 0.0
    %144 = vmatpush2.msra.mxu0 0.0
    %145 = vmatprep.subr.mxu0 0.0
    %146 = vmatpush2.msra.mxu0 0.0
    %147 = vmatprep.mubr.f32.mxu0 0.0
    %148 = vmatmul.mubr.f32.gmra.mxu0 %v60
    %v149 = vpop.f32.mrf.mxu0
    %v150 = vadd.f32 %v57, %v149
    %v151 = vpop.f32.mrf.mxu0
    %152 = vmatprep.mubr.f32.mxu0 0.0
    %153 = vmatmul.mubr.f32.gmra.mxu0 %v63
    %v154 = vpop.f32.mrf.mxu0
    %v155 = vadd.f32 %v57, %v154
    %v156 = vpop.f32.mrf.mxu0
    %157 = vmatprep.mubr.f32.mxu0 0.0
    %158 = vmatmul.mubr.f32.gmra.mxu0 %v66
    %v159 = vpop.f32.mrf.mxu0
    %v160 = vadd.f32 %v57, %v159
    %v161 = vpop.f32.mrf.mxu0
    %162 = vmatprep.mubr.f32.mxu0 0.0
    %163 = vmatmul.mubr.f32.gmra.mxu0 %v69
    %v164 = vpop.f32.mrf.mxu0
    %v165 = vadd.f32 %v57, %v164
    %v166 = vpop.f32.mrf.mxu0
    %167 = vmatprep.mubr.f32.mxu0 0.0
    %168 = vmatmul.mubr.f32.gmra.mxu0 %v72
    %v169 = vpop.f32.mrf.mxu0
    %v170 = vadd.f32 %v57, %v169
    %v171 = vpop.f32.mrf.mxu0
    %172 = vmatprep.mubr.f32.mxu0 0.0
    %173 = vmatmul.mubr.f32.gmra.mxu0 %v75
    %v174 = vpop.f32.mrf.mxu0
    %v175 = vadd.f32 %v57, %v174
    %v176 = vpop.f32.mrf.mxu0
    %177 = vmatprep.mubr.f32.mxu0 0.0
    %178 = vmatmul.mubr.f32.gmra.mxu0 %v78
    %v179 = vpop.f32.mrf.mxu0
    %v180 = vadd.f32 %v57, %v179
    %v181 = vpop.f32.mrf.mxu0
    %182 = vmatprep.mubr.f32.mxu0 0.0
    %183 = vmatmul.mubr.f32.gmra.mxu0 %v81
    %v184 = vpop.f32.mrf.mxu0
    %v185 = vadd.f32 %v57, %v184
    %v186 = vpop.f32.mrf.mxu0
    %187 = vdwg.mxu0
    %v188 = vlaneseq
    %v189 = vand.u32 %v188, 127
    %vm190 = vcmp.lt.s32.totalorder %v189, 96
    %v191 = vsel %vm190, 0.5, 1.0
    %v192 = vsel %vm190, 0.5, 0.0
    %vm193 = vcmask 261120
    %v195 = vsel %vm193, 0.0, 0
    %197 = vmatprep.subr.mxu0 0.0
    %198 = vmatpush1.msra.mxu0 0.0
    %199 = vmatprep.subr.mxu0 0.0
    %200 = vmatpush1.msra.mxu0 0.0
    %201 = vmatprep.subr.mxu0 0.0
    %202 = vmatpush1.msra.mxu0 0.0
    %203 = vmatprep.subr.mxu0 0.0
    %204 = vmatpush1.msra.mxu0 0.0
    %205 = vmatprep.subr.mxu0 0.0
    %206 = vmatpush1.msra.mxu0 0.0
    %207 = vmatprep.subr.mxu0 0.0
    %208 = vmatpush1.msra.mxu0 0.0
    %209 = vmatprep.subr.mxu0 0.0
    %210 = vmatpush1.msra.mxu0 0.0
    %211 = vmatprep.subr.mxu0 0.0
    %212 = vmatpush1.msra.mxu0 0.0
    %213 = vmatprep.subr.mxu0 0.0
    %214 = vmatpush1.msra.mxu0 0.0
    %215 = vmatprep.subr.mxu0 0.0
    %216 = vmatpush1.msra.mxu0 0.0
    %217 = vmatprep.subr.mxu0 0.0
    %218 = vmatpush1.msra.mxu0 0.0
    %219 = vmatprep.subr.mxu0 0.0
    %220 = vmatpush1.msra.mxu0 0.0
    %221 = vmatprep.subr.mxu0 0.0
    %222 = vmatpush1.msra.mxu0 %v30
    %223 = vmatprep.subr.mxu0 0.0
    %224 = vmatpush1.msra.mxu0 %v29
    %225 = vmatprep.subr.mxu0 0.0
    %226 = vmatpush1.msra.mxu0 %v28
    %227 = vmatprep.subr.mxu0 0.0
    %228 = vmatpush1.msra.mxu0 %v27
    %229 = vmatprep.subr.mxu0 0.0
    %230 = vmatpush2.msra.mxu0 0.0
    %231 = vmatprep.subr.mxu0 0.0
    %232 = vmatpush2.msra.mxu0 0.0
    %233 = vmatprep.subr.mxu0 0.0
    %234 = vmatpush2.msra.mxu0 0.0
    %235 = vmatprep.subr.mxu0 0.0
    %236 = vmatpush2.msra.mxu0 0.0
    %237 = vmatprep.subr.mxu0 0.0
    %238 = vmatpush2.msra.mxu0 0.0
    %239 = vmatprep.subr.mxu0 0.0
    %240 = vmatpush2.msra.mxu0 0.0
    %241 = vmatprep.subr.mxu0 0.0
    %242 = vmatpush2.msra.mxu0 0.0
    %243 = vmatprep.subr.mxu0 0.0
    %244 = vmatpush2.msra.mxu0 0.0
    %245 = vmatprep.subr.mxu0 0.0
    %246 = vmatpush2.msra.mxu0 0.0
    %247 = vmatprep.subr.mxu0 0.0
    %248 = vmatpush2.msra.mxu0 0.0
    %249 = vmatprep.subr.mxu0 0.0
    %250 = vmatpush2.msra.mxu0 0.0
    %251 = vmatprep.subr.mxu0 0.0
    %252 = vmatpush2.msra.mxu0 0.0
    %253 = vmatprep.subr.mxu0 0.0
    %254 = vmatpush2.msra.mxu0 0.0
    %255 = vmatprep.subr.mxu0 0.0
    %256 = vmatpush2.msra.mxu0 0.0
    %257 = vmatprep.subr.mxu0 0.0
    %258 = vmatpush2.msra.mxu0 0.0
    %259 = vmatprep.subr.mxu0 0.0
    %260 = vmatpush2.msra.mxu0 0.0
    %261 = vmatprep.mubr.f32.mxu0 0.0
    %262 = vmatmul.mubr.f32.gmra.mxu0 %v195
    %v263 = vpop.f32.mrf.mxu0
    %v264 = vadd.f32 0.0, %v263
    %v265 = vpop.f32.mrf.mxu0
    %266 = vdwg.mxu0
    %v267 = vadd.f32 %v150, %v264
    %v268 = vtanh.pop %v267
    %v269 = vmul.f32 %v268, %v191
    %v270 = vadd.f32 %v269, %v192
    %v271 = vmul.f32 %v270, 0.0
    %273 = vrot.lane.b32.xlu0 %v270, 32
    %v274 = vpop.permute.xlu0 %273
    %v276 = vmul.f32 %v270, %v274
    %278 = vrot.lane.b32.xlu0 %v276, 32
    %v279 = vpop.permute.xlu0 %278
    %v281 = vadd.f32 %v271, %v279
    %v282 = vtanh.pop %v281
    %284 = vrot.lane.b32.xlu0 %v282, 32
    %v285 = vpop.permute.xlu0 %284
    %v287 = vmul.f32 %v270, %v285
    %288 = vmatprep.subr.mxu0 0.0
    %289 = vmatpush1.msra.mxu0 0.0
    %290 = vmatprep.subr.mxu0 0.0
    %291 = vmatpush1.msra.mxu0 0.0
    %292 = vmatprep.subr.mxu0 0.0
    %293 = vmatpush1.msra.mxu0 0.0
    %294 = vmatprep.subr.mxu0 0.0
    %295 = vmatpush1.msra.mxu0 0.0
    %296 = vmatprep.subr.mxu0 0.0
    %297 = vmatpush1.msra.mxu0 0.0
    %298 = vmatprep.subr.mxu0 0.0
    %299 = vmatpush1.msra.mxu0 0.0
    %300 = vmatprep.subr.mxu0 0.0
    %301 = vmatpush1.msra.mxu0 0.0
    %302 = vmatprep.subr.mxu0 0.0
    %303 = vmatpush1.msra.mxu0 0.0
    %304 = vmatprep.subr.mxu0 0.0
    %305 = vmatpush1.msra.mxu0 0.0
    %306 = vmatprep.subr.mxu0 0.0
    %307 = vmatpush1.msra.mxu0 0.0
    %308 = vmatprep.subr.mxu0 0.0
    %309 = vmatpush1.msra.mxu0 0.0
    %310 = vmatprep.subr.mxu0 0.0
    %311 = vmatpush1.msra.mxu0 0.0
    %312 = vmatprep.subr.mxu0 0.0
    %313 = vmatpush1.msra.mxu0 %v39
    %314 = vmatprep.subr.mxu0 0.0
    %315 = vmatpush1.msra.mxu0 %v38
    %316 = vmatprep.subr.mxu0 0.0
    %317 = vmatpush1.msra.mxu0 %v37
    %318 = vmatprep.subr.mxu0 0.0
    %319 = vmatpush1.msra.mxu0 %v36
    %320 = vmatprep.subr.mxu0 0.0
    %321 = vmatpush2.msra.mxu0 0.0
    %322 = vmatprep.subr.mxu0 0.0
    %323 = vmatpush2.msra.mxu0 0.0
    %324 = vmatprep.subr.mxu0 0.0
    %325 = vmatpush2.msra.mxu0 0.0
    %326 = vmatprep.subr.mxu0 0.0
    %327 = vmatpush2.msra.mxu0 0.0
    %328 = vmatprep.subr.mxu0 0.0
    %329 = vmatpush2.msra.mxu0 0.0
    %330 = vmatprep.subr.mxu0 0.0
    %331 = vmatpush2.msra.mxu0 0.0
    %332 = vmatprep.subr.mxu0 0.0
    %333 = vmatpush2.msra.mxu0 0.0
    %334 = vmatprep.subr.mxu0 0.0
    %335 = vmatpush2.msra.mxu0 0.0
    %336 = vmatprep.subr.mxu0 0.0
    %337 = vmatpush2.msra.mxu0 0.0
    %338 = vmatprep.subr.mxu0 0.0
    %339 = vmatpush2.msra.mxu0 0.0
    %340 = vmatprep.subr.mxu0 0.0
    %341 = vmatpush2.msra.mxu0 0.0
    %342 = vmatprep.subr.mxu0 0.0
    %343 = vmatpush2.msra.mxu0 0.0
    %344 = vmatprep.subr.mxu0 0.0
    %345 = vmatpush2.msra.mxu0 0.0
    %346 = vmatprep.subr.mxu0 0.0
    %347 = vmatpush2.msra.mxu0 0.0
    %348 = vmatprep.subr.mxu0 0.0
    %349 = vmatpush2.msra.mxu0 0.0
    %350 = vmatprep.subr.mxu0 0.0
    %351 = vmatpush2.msra.mxu0 0.0
    %352 = vmatprep.mubr.f32.mxu0 0.0
    %353 = vmatmul.mubr.f32.gmra.mxu0 %v195
    %v354 = vpop.f32.mrf.mxu0
    %v355 = vadd.f32 0.0, %v354
    %v356 = vpop.f32.mrf.mxu0
    %357 = vdwg.mxu0
    %359 = vrot.lane.b32.xlu0 %v287, 64
    %v360 = vpop.permute.xlu0 %359
    %v361 = vsel %vm193, %v360, 0
    %363 = vmatprep.subr.mxu0 0.0
    %364 = vmatpush1.msra.mxu0 0.0
    %365 = vmatprep.subr.mxu0 0.0
    %366 = vmatpush1.msra.mxu0 0.0
    %367 = vmatprep.subr.mxu0 0.0
    %368 = vmatpush1.msra.mxu0 0.0
    %369 = vmatprep.subr.mxu0 0.0
    %370 = vmatpush1.msra.mxu0 0.0
    %371 = vmatprep.subr.mxu0 0.0
    %372 = vmatpush1.msra.mxu0 0.0
    %373 = vmatprep.subr.mxu0 0.0
    %374 = vmatpush1.msra.mxu0 0.0
    %375 = vmatprep.subr.mxu0 0.0
    %376 = vmatpush1.msra.mxu0 0.0
    %377 = vmatprep.subr.mxu0 0.0
    %378 = vmatpush1.msra.mxu0 0.0
    %379 = vmatprep.subr.mxu0 0.0
    %380 = vmatpush1.msra.mxu0 0.0
    %381 = vmatprep.subr.mxu0 0.0
    %382 = vmatpush1.msra.mxu0 0.0
    %383 = vmatprep.subr.mxu0 0.0
    %384 = vmatpush1.msra.mxu0 0.0
    %385 = vmatprep.subr.mxu0 0.0
    %386 = vmatpush1.msra.mxu0 0.0
    %387 = vmatprep.subr.mxu0 0.0
    %388 = vmatpush1.msra.mxu0 %v35
    %389 = vmatprep.subr.mxu0 0.0
    %390 = vmatpush1.msra.mxu0 %v34
    %391 = vmatprep.subr.mxu0 0.0
    %392 = vmatpush1.msra.mxu0 %v33
    %393 = vmatprep.subr.mxu0 0.0
    %394 = vmatpush1.msra.mxu0 %v32
    %395 = vmatprep.subr.mxu0 0.0
    %396 = vmatpush2.msra.mxu0 0.0
    %397 = vmatprep.subr.mxu0 0.0
    %398 = vmatpush2.msra.mxu0 0.0
    %399 = vmatprep.subr.mxu0 0.0
    %400 = vmatpush2.msra.mxu0 0.0
    %401 = vmatprep.subr.mxu0 0.0
    %402 = vmatpush2.msra.mxu0 0.0
    %403 = vmatprep.subr.mxu0 0.0
    %404 = vmatpush2.msra.mxu0 0.0
    %405 = vmatprep.subr.mxu0 0.0
    %406 = vmatpush2.msra.mxu0 0.0
    %407 = vmatprep.subr.mxu0 0.0
    %408 = vmatpush2.msra.mxu0 0.0
    %409 = vmatprep.subr.mxu0 0.0
    %410 = vmatpush2.msra.mxu0 0.0
    %411 = vmatprep.subr.mxu0 0.0
    %412 = vmatpush2.msra.mxu0 0.0
    %413 = vmatprep.subr.mxu0 0.0
    %414 = vmatpush2.msra.mxu0 0.0
    %415 = vmatprep.subr.mxu0 0.0
    %416 = vmatpush2.msra.mxu0 0.0
    %417 = vmatprep.subr.mxu0 0.0
    %418 = vmatpush2.msra.mxu0 0.0
    %419 = vmatprep.subr.mxu0 0.0
    %420 = vmatpush2.msra.mxu0 0.0
    %421 = vmatprep.subr.mxu0 0.0
    %422 = vmatpush2.msra.mxu0 0.0
    %423 = vmatprep.subr.mxu0 0.0
    %424 = vmatpush2.msra.mxu0 0.0
    %425 = vmatprep.subr.mxu0 0.0
    %426 = vmatpush2.msra.mxu0 0.0
    %427 = vmatprep.mubr.f32.mxu0 0.0
    %428 = vmatmul.mubr.f32.gmra.mxu0 %v361
    %v429 = vpop.f32.mrf.mxu0
    %v430 = vadd.f32 %v355, %v429
    %v431 = vpop.f32.mrf.mxu0
    %432 = vdwg.mxu0
    %v433 = vlaneseq
    %v434 = vshrl.u32 %v433, 7
    %v435 = vsub.s32 0, %v434
    %v436 = vrot.slane %v40, %v435
    %v437 = vadd.f32 %v430, %v436
    %v438 = vtanh.pop %v437
    %v439 = vmul.f32 %v438, %v191
    %v440 = vadd.f32 %v439, %v192
    %v441 = vmul.f32 %v440, 0.0
    %443 = vrot.lane.b32.xlu0 %v440, 32
    %v444 = vpop.permute.xlu0 %443
    %v446 = vmul.f32 %v440, %v444
    %448 = vrot.lane.b32.xlu0 %v446, 32
    %v449 = vpop.permute.xlu0 %448
    %v451 = vadd.f32 %v441, %v449
    %v452 = vtanh.pop %v451
    %454 = vrot.lane.b32.xlu0 %v452, 32
    %v455 = vpop.permute.xlu0 %454
    %v457 = vmul.f32 %v440, %v455
    %458 = vmatprep.subr.mxu0 0.0
    %459 = vmatpush1.msra.mxu0 0.0
    %460 = vmatprep.subr.mxu0 0.0
    %461 = vmatpush1.msra.mxu0 0.0
    %462 = vmatprep.subr.mxu0 0.0
    %463 = vmatpush1.msra.mxu0 0.0
    %464 = vmatprep.subr.mxu0 0.0
    %465 = vmatpush1.msra.mxu0 0.0
    %466 = vmatprep.subr.mxu0 0.0
    %467 = vmatpush1.msra.mxu0 0.0
    %468 = vmatprep.subr.mxu0 0.0
    %469 = vmatpush1.msra.mxu0 0.0
    %470 = vmatprep.subr.mxu0 0.0
    %471 = vmatpush1.msra.mxu0 0.0
    %472 = vmatprep.subr.mxu0 0.0
    %473 = vmatpush1.msra.mxu0 0.0
    %474 = vmatprep.subr.mxu0 0.0
    %475 = vmatpush1.msra.mxu0 0.0
    %476 = vmatprep.subr.mxu0 0.0
    %477 = vmatpush1.msra.mxu0 0.0
    %478 = vmatprep.subr.mxu0 0.0
    %479 = vmatpush1.msra.mxu0 0.0
    %480 = vmatprep.subr.mxu0 0.0
    %481 = vmatpush1.msra.mxu0 0.0
    %482 = vmatprep.subr.mxu0 0.0
    %483 = vmatpush1.msra.mxu0 %v30
    %484 = vmatprep.subr.mxu0 0.0
    %485 = vmatpush1.msra.mxu0 %v29
    %486 = vmatprep.subr.mxu0 0.0
    %487 = vmatpush1.msra.mxu0 %v28
    %488 = vmatprep.subr.mxu0 0.0
    %489 = vmatpush1.msra.mxu0 %v27
    %490 = vmatprep.subr.mxu0 0.0
    %491 = vmatpush2.msra.mxu0 0.0
    %492 = vmatprep.subr.mxu0 0.0
    %493 = vmatpush2.msra.mxu0 0.0
    %494 = vmatprep.subr.mxu0 0.0
    %495 = vmatpush2.msra.mxu0 0.0
    %496 = vmatprep.subr.mxu0 0.0
    %497 = vmatpush2.msra.mxu0 0.0
    %498 = vmatprep.subr.mxu0 0.0
    %499 = vmatpush2.msra.mxu0 0.0
    %500 = vmatprep.subr.mxu0 0.0
    %501 = vmatpush2.msra.mxu0 0.0
    %502 = vmatprep.subr.mxu0 0.0
    %503 = vmatpush2.msra.mxu0 0.0
    %504 = vmatprep.subr.mxu0 0.0
    %505 = vmatpush2.msra.mxu0 0.0
    %506 = vmatprep.subr.mxu0 0.0
    %507 = vmatpush2.msra.mxu0 0.0
    %508 = vmatprep.subr.mxu0 0.0
    %509 = vmatpush2.msra.mxu0 0.0
    %510 = vmatprep.subr.mxu0 0.0
    %511 = vmatpush2.msra.mxu0 0.0
    %512 = vmatprep.subr.mxu0 0.0
    %513 = vmatpush2.msra.mxu0 0.0
    %514 = vmatprep.subr.mxu0 0.0
    %515 = vmatpush2.msra.mxu0 0.0
    %516 = vmatprep.subr.mxu0 0.0
    %517 = vmatpush2.msra.mxu0 0.0
    %518 = vmatprep.subr.mxu0 0.0
    %519 = vmatpush2.msra.mxu0 0.0
    %520 = vmatprep.subr.mxu0 0.0
    %521 = vmatpush2.msra.mxu0 0.0
    %522 = vmatprep.mubr.f32.mxu0 0.0
    %523 = vmatmul.mubr.f32.gmra.mxu0 %v361
    %v524 = vpop.f32.mrf.mxu0
    %v525 = vadd.f32 0.0, %v524
    %v526 = vpop.f32.mrf.mxu0
    %527 = vdwg.mxu0
    %v528 = vadd.f32 %v155, %v525
    %v529 = vtanh.pop %v528
    %v530 = vmul.f32 %v529, %v191
    %v531 = vadd.f32 %v530, %v192
    %v532 = vmul.f32 %v531, %v281
    %534 = vrot.lane.b32.xlu0 %v531, 32
    %v535 = vpop.permute.xlu0 %534
    %v537 = vmul.f32 %v531, %v535
    %539 = vrot.lane.b32.xlu0 %v537, 32
    %v540 = vpop.permute.xlu0 %539
    %v542 = vadd.f32 %v532, %v540
    %v543 = vtanh.pop %v542
    %545 = vrot.lane.b32.xlu0 %v543, 32
    %v546 = vpop.permute.xlu0 %545
    %v548 = vmul.f32 %v531, %v546
    %550 = vrot.lane.b32.xlu0 %v457, 64
    %v551 = vpop.permute.xlu0 %550
    %v552 = vsel %vm193, %v551, 0
    %554 = vmatprep.subr.mxu0 0.0
    %555 = vmatpush1.msra.mxu0 0.0
    %556 = vmatprep.subr.mxu0 0.0
    %557 = vmatpush1.msra.mxu0 0.0
    %558 = vmatprep.subr.mxu0 0.0
    %559 = vmatpush1.msra.mxu0 0.0
    %560 = vmatprep.subr.mxu0 0.0
    %561 = vmatpush1.msra.mxu0 0.0
    %562 = vmatprep.subr.mxu0 0.0
    %563 = vmatpush1.msra.mxu0 0.0
    %564 = vmatprep.subr.mxu0 0.0
    %565 = vmatpush1.msra.mxu0 0.0
    %566 = vmatprep.subr.mxu0 0.0
    %567 = vmatpush1.msra.mxu0 0.0
    %568 = vmatprep.subr.mxu0 0.0
    %569 = vmatpush1.msra.mxu0 0.0
    %570 = vmatprep.subr.mxu0 0.0
    %571 = vmatpush1.msra.mxu0 0.0
    %572 = vmatprep.subr.mxu0 0.0
    %573 = vmatpush1.msra.mxu0 0.0
    %574 = vmatprep.subr.mxu0 0.0
    %575 = vmatpush1.msra.mxu0 0.0
    %576 = vmatprep.subr.mxu0 0.0
    %577 = vmatpush1.msra.mxu0 0.0
    %578 = vmatprep.subr.mxu0 0.0
    %579 = vmatpush1.msra.mxu0 %v39
    %580 = vmatprep.subr.mxu0 0.0
    %581 = vmatpush1.msra.mxu0 %v38
    %582 = vmatprep.subr.mxu0 0.0
    %583 = vmatpush1.msra.mxu0 %v37
    %584 = vmatprep.subr.mxu0 0.0
    %585 = vmatpush1.msra.mxu0 %v36
    %586 = vmatprep.subr.mxu0 0.0
    %587 = vmatpush2.msra.mxu0 0.0
    %588 = vmatprep.subr.mxu0 0.0
    %589 = vmatpush2.msra.mxu0 0.0
    %590 = vmatprep.subr.mxu0 0.0
    %591 = vmatpush2.msra.mxu0 0.0
    %592 = vmatprep.subr.mxu0 0.0
    %593 = vmatpush2.msra.mxu0 0.0
    %594 = vmatprep.subr.mxu0 0.0
    %595 = vmatpush2.msra.mxu0 0.0
    %596 = vmatprep.subr.mxu0 0.0
    %597 = vmatpush2.msra.mxu0 0.0
    %598 = vmatprep.subr.mxu0 0.0
    %599 = vmatpush2.msra.mxu0 0.0
    %600 = vmatprep.subr.mxu0 0.0
    %601 = vmatpush2.msra.mxu0 0.0
    %602 = vmatprep.subr.mxu0 0.0
    %603 = vmatpush2.msra.mxu0 0.0
    %604 = vmatprep.subr.mxu0 0.0
    %605 = vmatpush2.msra.mxu0 0.0
    %606 = vmatprep.subr.mxu0 0.0
    %607 = vmatpush2.msra.mxu0 0.0
    %608 = vmatprep.subr.mxu0 0.0
    %609 = vmatpush2.msra.mxu0 0.0
    %610 = vmatprep.subr.mxu0 0.0
    %611 = vmatpush2.msra.mxu0 0.0
    %612 = vmatprep.subr.mxu0 0.0
    %613 = vmatpush2.msra.mxu0 0.0
    %614 = vmatprep.subr.mxu0 0.0
    %615 = vmatpush2.msra.mxu0 0.0
    %616 = vmatprep.subr.mxu0 0.0
    %617 = vmatpush2.msra.mxu0 0.0
    %618 = vmatprep.mubr.f32.mxu0 0.0
    %619 = vmatmul.mubr.f32.gmra.mxu0 %v552
    %v620 = vpop.f32.mrf.mxu0
    %v621 = vadd.f32 0.0, %v620
    %v622 = vpop.f32.mrf.mxu0
    %623 = vdwg.mxu0
    %625 = vrot.lane.b32.xlu0 %v548, 64
    %v626 = vpop.permute.xlu0 %625
    %v627 = vsel %vm193, %v626, 0
    %629 = vmatprep.subr.mxu0 0.0
    %630 = vmatpush1.msra.mxu0 0.0
    %631 = vmatprep.subr.mxu0 0.0
    %632 = vmatpush1.msra.mxu0 0.0
    %633 = vmatprep.subr.mxu0 0.0
    %634 = vmatpush1.msra.mxu0 0.0
    %635 = vmatprep.subr.mxu0 0.0
    %636 = vmatpush1.msra.mxu0 0.0
    %637 = vmatprep.subr.mxu0 0.0
    %638 = vmatpush1.msra.mxu0 0.0
    %639 = vmatprep.subr.mxu0 0.0
    %640 = vmatpush1.msra.mxu0 0.0
    %641 = vmatprep.subr.mxu0 0.0
    %642 = vmatpush1.msra.mxu0 0.0
    %643 = vmatprep.subr.mxu0 0.0
    %644 = vmatpush1.msra.mxu0 0.0
    %645 = vmatprep.subr.mxu0 0.0
    %646 = vmatpush1.msra.mxu0 0.0
    %647 = vmatprep.subr.mxu0 0.0
    %648 = vmatpush1.msra.mxu0 0.0
    %649 = vmatprep.subr.mxu0 0.0
    %650 = vmatpush1.msra.mxu0 0.0
    %651 = vmatprep.subr.mxu0 0.0
    %652 = vmatpush1.msra.mxu0 0.0
    %653 = vmatprep.subr.mxu0 0.0
    %654 = vmatpush1.msra.mxu0 %v35
    %655 = vmatprep.subr.mxu0 0.0
    %656 = vmatpush1.msra.mxu0 %v34
    %657 = vmatprep.subr.mxu0 0.0
    %658 = vmatpush1.msra.mxu0 %v33
    %659 = vmatprep.subr.mxu0 0.0
    %660 = vmatpush1.msra.mxu0 %v32
    %661 = vmatprep.subr.mxu0 0.0
    %662 = vmatpush2.msra.mxu0 0.0
    %663 = vmatprep.subr.mxu0 0.0
    %664 = vmatpush2.msra.mxu0 0.0
    %665 = vmatprep.subr.mxu0 0.0
    %666 = vmatpush2.msra.mxu0 0.0
    %667 = vmatprep.subr.mxu0 0.0
    %668 = vmatpush2.msra.mxu0 0.0
    %669 = vmatprep.subr.mxu0 0.0
    %670 = vmatpush2.msra.mxu0 0.0
    %671 = vmatprep.subr.mxu0 0.0
    %672 = vmatpush2.msra.mxu0 0.0
    %673 = vmatprep.subr.mxu0 0.0
    %674 = vmatpush2.msra.mxu0 0.0
    %675 = vmatprep.subr.mxu0 0.0
    %676 = vmatpush2.msra.mxu0 0.0
    %677 = vmatprep.subr.mxu0 0.0
    %678 = vmatpush2.msra.mxu0 0.0
    %679 = vmatprep.subr.mxu0 0.0
    %680 = vmatpush2.msra.mxu0 0.0
    %681 = vmatprep.subr.mxu0 0.0
    %682 = vmatpush2.msra.mxu0 0.0
    %683 = vmatprep.subr.mxu0 0.0
    %684 = vmatpush2.msra.mxu0 0.0
    %685 = vmatprep.subr.mxu0 0.0
    %686 = vmatpush2.msra.mxu0 0.0
    %687 = vmatprep.subr.mxu0 0.0
    %688 = vmatpush2.msra.mxu0 0.0
    %689 = vmatprep.subr.mxu0 0.0
    %690 = vmatpush2.msra.mxu0 0.0
    %691 = vmatprep.subr.mxu0 0.0
    %692 = vmatpush2.msra.mxu0 0.0
    %693 = vmatprep.mubr.f32.mxu0 0.0
    %694 = vmatmul.mubr.f32.gmra.mxu0 %v627
    %v695 = vpop.f32.mrf.mxu0
    %v696 = vadd.f32 %v621, %v695
    %v697 = vpop.f32.mrf.mxu0
    %698 = vdwg.mxu0
    %v699 = vadd.f32 %v696, %v436
    %v700 = vtanh.pop %v699
    %v701 = vmul.f32 %v700, %v191
    %v702 = vadd.f32 %v701, %v192
    %v703 = vmul.f32 %v702, %v451
    %705 = vrot.lane.b32.xlu0 %v702, 32
    %v706 = vpop.permute.xlu0 %705
    %v708 = vmul.f32 %v702, %v706
    %710 = vrot.lane.b32.xlu0 %v708, 32
    %v711 = vpop.permute.xlu0 %710
    %v713 = vadd.f32 %v703, %v711
    %v714 = vtanh.pop %v713
    %716 = vrot.lane.b32.xlu0 %v714, 32
    %v717 = vpop.permute.xlu0 %716
    %v719 = vmul.f32 %v702, %v717
    %720 = vmatprep.subr.mxu0 0.0
    %721 = vmatpush1.msra.mxu0 0.0
    %722 = vmatprep.subr.mxu0 0.0
    %723 = vmatpush1.msra.mxu0 0.0
    %724 = vmatprep.subr.mxu0 0.0
    %725 = vmatpush1.msra.mxu0 0.0
    %726 = vmatprep.subr.mxu0 0.0
    %727 = vmatpush1.msra.mxu0 0.0
    %728 = vmatprep.subr.mxu0 0.0
    %729 = vmatpush1.msra.mxu0 0.0
    %730 = vmatprep.subr.mxu0 0.0
    %731 = vmatpush1.msra.mxu0 0.0
    %732 = vmatprep.subr.mxu0 0.0
    %733 = vmatpush1.msra.mxu0 0.0
    %734 = vmatprep.subr.mxu0 0.0
    %735 = vmatpush1.msra.mxu0 0.0
    %736 = vmatprep.subr.mxu0 0.0
    %737 = vmatpush1.msra.mxu0 0.0
    %738 = vmatprep.subr.mxu0 0.0
    %739 = vmatpush1.msra.mxu0 0.0
    %740 = vmatprep.subr.mxu0 0.0
    %741 = vmatpush1.msra.mxu0 0.0
    %742 = vmatprep.subr.mxu0 0.0
    %743 = vmatpush1.msra.mxu0 0.0
    %744 = vmatprep.subr.mxu0 0.0
    %745 = vmatpush1.msra.mxu0 %v30
    %746 = vmatprep.subr.mxu0 0.0
    %747 = vmatpush1.msra.mxu0 %v29
    %748 = vmatprep.subr.mxu0 0.0
    %749 = vmatpush1.msra.mxu0 %v28
    %750 = vmatprep.subr.mxu0 0.0
    %751 = vmatpush1.msra.mxu0 %v27
    %752 = vmatprep.subr.mxu0 0.0
    %753 = vmatpush2.msra.mxu0 0.0
    %754 = vmatprep.subr.mxu0 0.0
    %755 = vmatpush2.msra.mxu0 0.0
    %756 = vmatprep.subr.mxu0 0.0
    %757 = vmatpush2.msra.mxu0 0.0
    %758 = vmatprep.subr.mxu0 0.0
    %759 = vmatpush2.msra.mxu0 0.0
    %760 = vmatprep.subr.mxu0 0.0
    %761 = vmatpush2.msra.mxu0 0.0
    %762 = vmatprep.subr.mxu0 0.0
    %763 = vmatpush2.msra.mxu0 0.0
    %764 = vmatprep.subr.mxu0 0.0
    %765 = vmatpush2.msra.mxu0 0.0
    %766 = vmatprep.subr.mxu0 0.0
    %767 = vmatpush2.msra.mxu0 0.0
    %768 = vmatprep.subr.mxu0 0.0
    %769 = vmatpush2.msra.mxu0 0.0
    %770 = vmatprep.subr.mxu0 0.0
    %771 = vmatpush2.msra.mxu0 0.0
    %772 = vmatprep.subr.mxu0 0.0
    %773 = vmatpush2.msra.mxu0 0.0
    %774 = vmatprep.subr.mxu0 0.0
    %775 = vmatpush2.msra.mxu0 0.0
    %776 = vmatprep.subr.mxu0 0.0
    %777 = vmatpush2.msra.mxu0 0.0
    %778 = vmatprep.subr.mxu0 0.0
    %779 = vmatpush2.msra.mxu0 0.0
    %780 = vmatprep.subr.mxu0 0.0
    %781 = vmatpush2.msra.mxu0 0.0
    %782 = vmatprep.subr.mxu0 0.0
    %783 = vmatpush2.msra.mxu0 0.0
    %784 = vmatprep.mubr.f32.mxu0 0.0
    %785 = vmatmul.mubr.f32.gmra.mxu0 %v627
    %v786 = vpop.f32.mrf.mxu0
    %v787 = vadd.f32 0.0, %v786
    %v788 = vpop.f32.mrf.mxu0
    %789 = vdwg.mxu0
    %v790 = vadd.f32 %v160, %v787
    %v791 = vtanh.pop %v790
    %v792 = vmul.f32 %v791, %v191
    %v793 = vadd.f32 %v792, %v192
    %v794 = vmul.f32 %v793, %v542
    %796 = vrot.lane.b32.xlu0 %v793, 32
    %v797 = vpop.permute.xlu0 %796
    %v799 = vmul.f32 %v793, %v797
    %801 = vrot.lane.b32.xlu0 %v799, 32
    %v802 = vpop.permute.xlu0 %801
    %v804 = vadd.f32 %v794, %v802
    %v805 = vtanh.pop %v804
    %807 = vrot.lane.b32.xlu0 %v805, 32
    %v808 = vpop.permute.xlu0 %807
    %v810 = vmul.f32 %v793, %v808
    %812 = vrot.lane.b32.xlu0 %v719, 64
    %v813 = vpop.permute.xlu0 %812
    %v814 = vsel %vm193, %v813, 0
    %816 = vmatprep.subr.mxu0 0.0
    %817 = vmatpush1.msra.mxu0 0.0
    %818 = vmatprep.subr.mxu0 0.0
    %819 = vmatpush1.msra.mxu0 0.0
    %820 = vmatprep.subr.mxu0 0.0
    %821 = vmatpush1.msra.mxu0 0.0
    %822 = vmatprep.subr.mxu0 0.0
    %823 = vmatpush1.msra.mxu0 0.0
    %824 = vmatprep.subr.mxu0 0.0
    %825 = vmatpush1.msra.mxu0 0.0
    %826 = vmatprep.subr.mxu0 0.0
    %827 = vmatpush1.msra.mxu0 0.0
    %828 = vmatprep.subr.mxu0 0.0
    %829 = vmatpush1.msra.mxu0 0.0
    %830 = vmatprep.subr.mxu0 0.0
    %831 = vmatpush1.msra.mxu0 0.0
    %832 = vmatprep.subr.mxu0 0.0
    %833 = vmatpush1.msra.mxu0 0.0
    %834 = vmatprep.subr.mxu0 0.0
    %835 = vmatpush1.msra.mxu0 0.0
    %836 = vmatprep.subr.mxu0 0.0
    %837 = vmatpush1.msra.mxu0 0.0
    %838 = vmatprep.subr.mxu0 0.0
    %839 = vmatpush1.msra.mxu0 0.0
    %840 = vmatprep.subr.mxu0 0.0
    %841 = vmatpush1.msra.mxu0 %v39
    %842 = vmatprep.subr.mxu0 0.0
    %843 = vmatpush1.msra.mxu0 %v38
    %844 = vmatprep.subr.mxu0 0.0
    %845 = vmatpush1.msra.mxu0 %v37
    %846 = vmatprep.subr.mxu0 0.0
    %847 = vmatpush1.msra.mxu0 %v36
    %848 = vmatprep.subr.mxu0 0.0
    %849 = vmatpush2.msra.mxu0 0.0
    %850 = vmatprep.subr.mxu0 0.0
    %851 = vmatpush2.msra.mxu0 0.0
    %852 = vmatprep.subr.mxu0 0.0
    %853 = vmatpush2.msra.mxu0 0.0
    %854 = vmatprep.subr.mxu0 0.0
    %855 = vmatpush2.msra.mxu0 0.0
    %856 = vmatprep.subr.mxu0 0.0
    %857 = vmatpush2.msra.mxu0 0.0
    %858 = vmatprep.subr.mxu0 0.0
    %859 = vmatpush2.msra.mxu0 0.0
    %860 = vmatprep.subr.mxu0 0.0
    %861 = vmatpush2.msra.mxu0 0.0
    %862 = vmatprep.subr.mxu0 0.0
    %863 = vmatpush2.msra.mxu0 0.0
    %864 = vmatprep.subr.mxu0 0.0
    %865 = vmatpush2.msra.mxu0 0.0
    %866 = vmatprep.subr.mxu0 0.0
    %867 = vmatpush2.msra.mxu0 0.0
    %868 = vmatprep.subr.mxu0 0.0
    %869 = vmatpush2.msra.mxu0 0.0
    %870 = vmatprep.subr.mxu0 0.0
    %871 = vmatpush2.msra.mxu0 0.0
    %872 = vmatprep.subr.mxu0 0.0
    %873 = vmatpush2.msra.mxu0 0.0
    %874 = vmatprep.subr.mxu0 0.0
    %875 = vmatpush2.msra.mxu0 0.0
    %876 = vmatprep.subr.mxu0 0.0
    %877 = vmatpush2.msra.mxu0 0.0
    %878 = vmatprep.subr.mxu0 0.0
    %879 = vmatpush2.msra.mxu0 0.0
    %880 = vmatprep.mubr.f32.mxu0 0.0
    %881 = vmatmul.mubr.f32.gmra.mxu0 %v814
    %v882 = vpop.f32.mrf.mxu0
    %v883 = vadd.f32 0.0, %v882
    %v884 = vpop.f32.mrf.mxu0
    %885 = vdwg.mxu0
    %887 = vrot.lane.b32.xlu0 %v810, 64
    %v888 = vpop.permute.xlu0 %887
    %v889 = vsel %vm193, %v888, 0
    %891 = vmatprep.subr.mxu0 0.0
    %892 = vmatpush1.msra.mxu0 0.0
    %893 = vmatprep.subr.mxu0 0.0
    %894 = vmatpush1.msra.mxu0 0.0
    %895 = vmatprep.subr.mxu0 0.0
    %896 = vmatpush1.msra.mxu0 0.0
    %897 = vmatprep.subr.mxu0 0.0
    %898 = vmatpush1.msra.mxu0 0.0
    %899 = vmatprep.subr.mxu0 0.0
    %900 = vmatpush1.msra.mxu0 0.0
    %901 = vmatprep.subr.mxu0 0.0
    %902 = vmatpush1.msra.mxu0 0.0
    %903 = vmatprep.subr.mxu0 0.0
    %904 = vmatpush1.msra.mxu0 0.0
    %905 = vmatprep.subr.mxu0 0.0
    %906 = vmatpush1.msra.mxu0 0.0
    %907 = vmatprep.subr.mxu0 0.0
    %908 = vmatpush1.msra.mxu0 0.0
    %909 = vmatprep.subr.mxu0 0.0
    %910 = vmatpush1.msra.mxu0 0.0
    %911 = vmatprep.subr.mxu0 0.0
    %912 = vmatpush1.msra.mxu0 0.0
    %913 = vmatprep.subr.mxu0 0.0
    %914 = vmatpush1.msra.mxu0 0.0
    %915 = vmatprep.subr.mxu0 0.0
    %916 = vmatpush1.msra.mxu0 %v35
    %917 = vmatprep.subr.mxu0 0.0
    %918 = vmatpush1.msra.mxu0 %v34
    %919 = vmatprep.subr.mxu0 0.0
    %920 = vmatpush1.msra.mxu0 %v33
    %921 = vmatprep.subr.mxu0 0.0
    %922 = vmatpush1.msra.mxu0 %v32
    %923 = vmatprep.subr.mxu0 0.0
    %924 = vmatpush2.msra.mxu0 0.0
    %925 = vmatprep.subr.mxu0 0.0
    %926 = vmatpush2.msra.mxu0 0.0
    %927 = vmatprep.subr.mxu0 0.0
    %928 = vmatpush2.msra.mxu0 0.0
    %929 = vmatprep.subr.mxu0 0.0
    %930 = vmatpush2.msra.mxu0 0.0
    %931 = vmatprep.subr.mxu0 0.0
    %932 = vmatpush2.msra.mxu0 0.0
    %933 = vmatprep.subr.mxu0 0.0
    %934 = vmatpush2.msra.mxu0 0.0
    %935 = vmatprep.subr.mxu0 0.0
    %936 = vmatpush2.msra.mxu0 0.0
    %937 = vmatprep.subr.mxu0 0.0
    %938 = vmatpush2.msra.mxu0 0.0
    %939 = vmatprep.subr.mxu0 0.0
    %940 = vmatpush2.msra.mxu0 0.0
    %941 = vmatprep.subr.mxu0 0.0
    %942 = vmatpush2.msra.mxu0 0.0
    %943 = vmatprep.subr.mxu0 0.0
    %944 = vmatpush2.msra.mxu0 0.0
    %945 = vmatprep.subr.mxu0 0.0
    %946 = vmatpush2.msra.mxu0 0.0
    %947 = vmatprep.subr.mxu0 0.0
    %948 = vmatpush2.msra.mxu0 0.0
    %949 = vmatprep.subr.mxu0 0.0
    %950 = vmatpush2.msra.mxu0 0.0
    %951 = vmatprep.subr.mxu0 0.0
    %952 = vmatpush2.msra.mxu0 0.0
    %953 = vmatprep.subr.mxu0 0.0
    %954 = vmatpush2.msra.mxu0 0.0
    %955 = vmatprep.mubr.f32.mxu0 0.0
    %956 = vmatmul.mubr.f32.gmra.mxu0 %v889
    %v957 = vpop.f32.mrf.mxu0
    %v958 = vadd.f32 %v883, %v957
    %v959 = vpop.f32.mrf.mxu0
    %960 = vdwg.mxu0
    %v961 = vadd.f32 %v958, %v436
    %v962 = vtanh.pop %v961
    %v963 = vmul.f32 %v962, %v191
    %v964 = vadd.f32 %v963, %v192
    %v965 = vmul.f32 %v964, %v713
    %967 = vrot.lane.b32.xlu0 %v964, 32
    %v968 = vpop.permute.xlu0 %967
    %v970 = vmul.f32 %v964, %v968
    %972 = vrot.lane.b32.xlu0 %v970, 32
    %v973 = vpop.permute.xlu0 %972
    %v975 = vadd.f32 %v965, %v973
    %v976 = vtanh.pop %v975
    %978 = vrot.lane.b32.xlu0 %v976, 32
    %v979 = vpop.permute.xlu0 %978
    %v981 = vmul.f32 %v964, %v979
    %982 = vmatprep.subr.mxu0 0.0
    %983 = vmatpush1.msra.mxu0 0.0
    %984 = vmatprep.subr.mxu0 0.0
    %985 = vmatpush1.msra.mxu0 0.0
    %986 = vmatprep.subr.mxu0 0.0
    %987 = vmatpush1.msra.mxu0 0.0
    %988 = vmatprep.subr.mxu0 0.0
    %989 = vmatpush1.msra.mxu0 0.0
    %990 = vmatprep.subr.mxu0 0.0
    %991 = vmatpush1.msra.mxu0 0.0
    %992 = vmatprep.subr.mxu0 0.0
    %993 = vmatpush1.msra.mxu0 0.0
    %994 = vmatprep.subr.mxu0 0.0
    %995 = vmatpush1.msra.mxu0 0.0
    %996 = vmatprep.subr.mxu0 0.0
    %997 = vmatpush1.msra.mxu0 0.0
    %998 = vmatprep.subr.mxu0 0.0
    %999 = vmatpush1.msra.mxu0 0.0
    %1000 = vmatprep.subr.mxu0 0.0
    %1001 = vmatpush1.msra.mxu0 0.0
    %1002 = vmatprep.subr.mxu0 0.0
    %1003 = vmatpush1.msra.mxu0 0.0
    %1004 = vmatprep.subr.mxu0 0.0
    %1005 = vmatpush1.msra.mxu0 0.0
    %1006 = vmatprep.subr.mxu0 0.0
    %1007 = vmatpush1.msra.mxu0 %v30
    %1008 = vmatprep.subr.mxu0 0.0
    %1009 = vmatpush1.msra.mxu0 %v29
    %1010 = vmatprep.subr.mxu0 0.0
    %1011 = vmatpush1.msra.mxu0 %v28
    %1012 = vmatprep.subr.mxu0 0.0
    %1013 = vmatpush1.msra.mxu0 %v27
    %1014 = vmatprep.subr.mxu0 0.0
    %1015 = vmatpush2.msra.mxu0 0.0
    %1016 = vmatprep.subr.mxu0 0.0
    %1017 = vmatpush2.msra.mxu0 0.0
    %1018 = vmatprep.subr.mxu0 0.0
    %1019 = vmatpush2.msra.mxu0 0.0
    %1020 = vmatprep.subr.mxu0 0.0
    %1021 = vmatpush2.msra.mxu0 0.0
    %1022 = vmatprep.subr.mxu0 0.0
    %1023 = vmatpush2.msra.mxu0 0.0
    %1024 = vmatprep.subr.mxu0 0.0
    %1025 = vmatpush2.msra.mxu0 0.0
    %1026 = vmatprep.subr.mxu0 0.0
    %1027 = vmatpush2.msra.mxu0 0.0
    %1028 = vmatprep.subr.mxu0 0.0
    %1029 = vmatpush2.msra.mxu0 0.0
    %1030 = vmatprep.subr.mxu0 0.0
    %1031 = vmatpush2.msra.mxu0 0.0
    %1032 = vmatprep.subr.mxu0 0.0
    %1033 = vmatpush2.msra.mxu0 0.0
    %1034 = vmatprep.subr.mxu0 0.0
    %1035 = vmatpush2.msra.mxu0 0.0
    %1036 = vmatprep.subr.mxu0 0.0
    %1037 = vmatpush2.msra.mxu0 0.0
    %1038 = vmatprep.subr.mxu0 0.0
    %1039 = vmatpush2.msra.mxu0 0.0
    %1040 = vmatprep.subr.mxu0 0.0
    %1041 = vmatpush2.msra.mxu0 0.0
    %1042 = vmatprep.subr.mxu0 0.0
    %1043 = vmatpush2.msra.mxu0 0.0
    %1044 = vmatprep.subr.mxu0 0.0
    %1045 = vmatpush2.msra.mxu0 0.0
    %1046 = vmatprep.mubr.f32.mxu0 0.0
    %1047 = vmatmul.mubr.f32.gmra.mxu0 %v889
    %v1048 = vpop.f32.mrf.mxu0
    %v1049 = vadd.f32 0.0, %v1048
    %v1050 = vpop.f32.mrf.mxu0
    %1051 = vdwg.mxu0
    %v1052 = vadd.f32 %v165, %v1049
    %v1053 = vtanh.pop %v1052
    %v1054 = vmul.f32 %v1053, %v191
    %v1055 = vadd.f32 %v1054, %v192
    %v1056 = vmul.f32 %v1055, %v804
    %1058 = vrot.lane.b32.xlu0 %v1055, 32
    %v1059 = vpop.permute.xlu0 %1058
    %v1061 = vmul.f32 %v1055, %v1059
    %1063 = vrot.lane.b32.xlu0 %v1061, 32
    %v1064 = vpop.permute.xlu0 %1063
    %v1066 = vadd.f32 %v1056, %v1064
    %v1067 = vtanh.pop %v1066
    %1069 = vrot.lane.b32.xlu0 %v1067, 32
    %v1070 = vpop.permute.xlu0 %1069
    %v1072 = vmul.f32 %v1055, %v1070
    %1074 = vrot.lane.b32.xlu0 %v981, 64
    %v1075 = vpop.permute.xlu0 %1074
    %v1076 = vsel %vm193, %v1075, 0
    %1078 = vmatprep.subr.mxu0 0.0
    %1079 = vmatpush1.msra.mxu0 0.0
    %1080 = vmatprep.subr.mxu0 0.0
    %1081 = vmatpush1.msra.mxu0 0.0
    %1082 = vmatprep.subr.mxu0 0.0
    %1083 = vmatpush1.msra.mxu0 0.0
    %1084 = vmatprep.subr.mxu0 0.0
    %1085 = vmatpush1.msra.mxu0 0.0
    %1086 = vmatprep.subr.mxu0 0.0
    %1087 = vmatpush1.msra.mxu0 0.0
    %1088 = vmatprep.subr.mxu0 0.0
    %1089 = vmatpush1.msra.mxu0 0.0
    %1090 = vmatprep.subr.mxu0 0.0
    %1091 = vmatpush1.msra.mxu0 0.0
    %1092 = vmatprep.subr.mxu0 0.0
    %1093 = vmatpush1.msra.mxu0 0.0
    %1094 = vmatprep.subr.mxu0 0.0
    %1095 = vmatpush1.msra.mxu0 0.0
    %1096 = vmatprep.subr.mxu0 0.0
    %1097 = vmatpush1.msra.mxu0 0.0
    %1098 = vmatprep.subr.mxu0 0.0
    %1099 = vmatpush1.msra.mxu0 0.0
    %1100 = vmatprep.subr.mxu0 0.0
    %1101 = vmatpush1.msra.mxu0 0.0
    %1102 = vmatprep.subr.mxu0 0.0
    %1103 = vmatpush1.msra.mxu0 %v39
    %1104 = vmatprep.subr.mxu0 0.0
    %1105 = vmatpush1.msra.mxu0 %v38
    %1106 = vmatprep.subr.mxu0 0.0
    %1107 = vmatpush1.msra.mxu0 %v37
    %1108 = vmatprep.subr.mxu0 0.0
    %1109 = vmatpush1.msra.mxu0 %v36
    %1110 = vmatprep.subr.mxu0 0.0
    %1111 = vmatpush2.msra.mxu0 0.0
    %1112 = vmatprep.subr.mxu0 0.0
    %1113 = vmatpush2.msra.mxu0 0.0
    %1114 = vmatprep.subr.mxu0 0.0
    %1115 = vmatpush2.msra.mxu0 0.0
    %1116 = vmatprep.subr.mxu0 0.0
    %1117 = vmatpush2.msra.mxu0 0.0
    %1118 = vmatprep.subr.mxu0 0.0
    %1119 = vmatpush2.msra.mxu0 0.0
    %1120 = vmatprep.subr.mxu0 0.0
    %1121 = vmatpush2.msra.mxu0 0.0
    %1122 = vmatprep.subr.mxu0 0.0
    %1123 = vmatpush2.msra.mxu0 0.0
    %1124 = vmatprep.subr.mxu0 0.0
    %1125 = vmatpush2.msra.mxu0 0.0
    %1126 = vmatprep.subr.mxu0 0.0
    %1127 = vmatpush2.msra.mxu0 0.0
    %1128 = vmatprep.subr.mxu0 0.0
    %1129 = vmatpush2.msra.mxu0 0.0
    %1130 = vmatprep.subr.mxu0 0.0
    %1131 = vmatpush2.msra.mxu0 0.0
    %1132 = vmatprep.subr.mxu0 0.0
    %1133 = vmatpush2.msra.mxu0 0.0
    %1134 = vmatprep.subr.mxu0 0.0
    %1135 = vmatpush2.msra.mxu0 0.0
    %1136 = vmatprep.subr.mxu0 0.0
    %1137 = vmatpush2.msra.mxu0 0.0
    %1138 = vmatprep.subr.mxu0 0.0
    %1139 = vmatpush2.msra.mxu0 0.0
    %1140 = vmatprep.subr.mxu0 0.0
    %1141 = vmatpush2.msra.mxu0 0.0
    %1142 = vmatprep.mubr.f32.mxu0 0.0
    %1143 = vmatmul.mubr.f32.gmra.mxu0 %v1076
    %v1144 = vpop.f32.mrf.mxu0
    %v1145 = vadd.f32 0.0, %v1144
    %v1146 = vpop.f32.mrf.mxu0
    %1147 = vdwg.mxu0
    %1149 = vrot.lane.b32.xlu0 %v1072, 64
    %v1150 = vpop.permute.xlu0 %1149
    %v1151 = vsel %vm193, %v1150, 0
    %1153 = vmatprep.subr.mxu0 0.0
    %1154 = vmatpush1.msra.mxu0 0.0
    %1155 = vmatprep.subr.mxu0 0.0
    %1156 = vmatpush1.msra.mxu0 0.0
    %1157 = vmatprep.subr.mxu0 0.0
    %1158 = vmatpush1.msra.mxu0 0.0
    %1159 = vmatprep.subr.mxu0 0.0
    %1160 = vmatpush1.msra.mxu0 0.0
    %1161 = vmatprep.subr.mxu0 0.0
    %1162 = vmatpush1.msra.mxu0 0.0
    %1163 = vmatprep.subr.mxu0 0.0
    %1164 = vmatpush1.msra.mxu0 0.0
    %1165 = vmatprep.subr.mxu0 0.0
    %1166 = vmatpush1.msra.mxu0 0.0
    %1167 = vmatprep.subr.mxu0 0.0
    %1168 = vmatpush1.msra.mxu0 0.0
    %1169 = vmatprep.subr.mxu0 0.0
    %1170 = vmatpush1.msra.mxu0 0.0
    %1171 = vmatprep.subr.mxu0 0.0
    %1172 = vmatpush1.msra.mxu0 0.0
    %1173 = vmatprep.subr.mxu0 0.0
    %1174 = vmatpush1.msra.mxu0 0.0
    %1175 = vmatprep.subr.mxu0 0.0
    %1176 = vmatpush1.msra.mxu0 0.0
    %1177 = vmatprep.subr.mxu0 0.0
    %1178 = vmatpush1.msra.mxu0 %v35
    %1179 = vmatprep.subr.mxu0 0.0
    %1180 = vmatpush1.msra.mxu0 %v34
    %1181 = vmatprep.subr.mxu0 0.0
    %1182 = vmatpush1.msra.mxu0 %v33
    %1183 = vmatprep.subr.mxu0 0.0
    %1184 = vmatpush1.msra.mxu0 %v32
    %1185 = vmatprep.subr.mxu0 0.0
    %1186 = vmatpush2.msra.mxu0 0.0
    %1187 = vmatprep.subr.mxu0 0.0
    %1188 = vmatpush2.msra.mxu0 0.0
    %1189 = vmatprep.subr.mxu0 0.0
    %1190 = vmatpush2.msra.mxu0 0.0
    %1191 = vmatprep.subr.mxu0 0.0
    %1192 = vmatpush2.msra.mxu0 0.0
    %1193 = vmatprep.subr.mxu0 0.0
    %1194 = vmatpush2.msra.mxu0 0.0
    %1195 = vmatprep.subr.mxu0 0.0
    %1196 = vmatpush2.msra.mxu0 0.0
    %1197 = vmatprep.subr.mxu0 0.0
    %1198 = vmatpush2.msra.mxu0 0.0
    %1199 = vmatprep.subr.mxu0 0.0
    %1200 = vmatpush2.msra.mxu0 0.0
    %1201 = vmatprep.subr.mxu0 0.0
    %1202 = vmatpush2.msra.mxu0 0.0
    %1203 = vmatprep.subr.mxu0 0.0
    %1204 = vmatpush2.msra.mxu0 0.0
    %1205 = vmatprep.subr.mxu0 0.0
    %1206 = vmatpush2.msra.mxu0 0.0
    %1207 = vmatprep.subr.mxu0 0.0
    %1208 = vmatpush2.msra.mxu0 0.0
    %1209 = vmatprep.subr.mxu0 0.0
    %1210 = vmatpush2.msra.mxu0 0.0
    %1211 = vmatprep.subr.mxu0 0.0
    %1212 = vmatpush2.msra.mxu0 0.0
    %1213 = vmatprep.subr.mxu0 0.0
    %1214 = vmatpush2.msra.mxu0 0.0
    %1215 = vmatprep.subr.mxu0 0.0
    %1216 = vmatpush2.msra.mxu0 0.0
    %1217 = vmatprep.mubr.f32.mxu0 0.0
    %1218 = vmatmul.mubr.f32.gmra.mxu0 %v1151
    %v1219 = vpop.f32.mrf.mxu0
    %v1220 = vadd.f32 %v1145, %v1219
    %v1221 = vpop.f32.mrf.mxu0
    %1222 = vdwg.mxu0
    %v1223 = vadd.f32 %v1220, %v436
    %v1224 = vtanh.pop %v1223
    %v1225 = vmul.f32 %v1224, %v191
    %v1226 = vadd.f32 %v1225, %v192
    %v1227 = vmul.f32 %v1226, %v975
    %1229 = vrot.lane.b32.xlu0 %v1226, 32
    %v1230 = vpop.permute.xlu0 %1229
    %v1232 = vmul.f32 %v1226, %v1230
    %1234 = vrot.lane.b32.xlu0 %v1232, 32
    %v1235 = vpop.permute.xlu0 %1234
    %v1237 = vadd.f32 %v1227, %v1235
    %v1238 = vtanh.pop %v1237
    %1240 = vrot.lane.b32.xlu0 %v1238, 32
    %v1241 = vpop.permute.xlu0 %1240
    %v1243 = vmul.f32 %v1226, %v1241
    %1244 = vmatprep.subr.mxu0 0.0
    %1245 = vmatpush1.msra.mxu0 0.0
    %1246 = vmatprep.subr.mxu0 0.0
    %1247 = vmatpush1.msra.mxu0 0.0
    %1248 = vmatprep.subr.mxu0 0.0
    %1249 = vmatpush1.msra.mxu0 0.0
    %1250 = vmatprep.subr.mxu0 0.0
    %1251 = vmatpush1.msra.mxu0 0.0
    %1252 = vmatprep.subr.mxu0 0.0
    %1253 = vmatpush1.msra.mxu0 0.0
    %1254 = vmatprep.subr.mxu0 0.0
    %1255 = vmatpush1.msra.mxu0 0.0
    %1256 = vmatprep.subr.mxu0 0.0
    %1257 = vmatpush1.msra.mxu0 0.0
    %1258 = vmatprep.subr.mxu0 0.0
    %1259 = vmatpush1.msra.mxu0 0.0
    %1260 = vmatprep.subr.mxu0 0.0
    %1261 = vmatpush1.msra.mxu0 0.0
    %1262 = vmatprep.subr.mxu0 0.0
    %1263 = vmatpush1.msra.mxu0 0.0
    %1264 = vmatprep.subr.mxu0 0.0
    %1265 = vmatpush1.msra.mxu0 0.0
    %1266 = vmatprep.subr.mxu0 0.0
    %1267 = vmatpush1.msra.mxu0 0.0
    %1268 = vmatprep.subr.mxu0 0.0
    %1269 = vmatpush1.msra.mxu0 %v30
    %1270 = vmatprep.subr.mxu0 0.0
    %1271 = vmatpush1.msra.mxu0 %v29
    %1272 = vmatprep.subr.mxu0 0.0
    %1273 = vmatpush1.msra.mxu0 %v28
    %1274 = vmatprep.subr.mxu0 0.0
    %1275 = vmatpush1.msra.mxu0 %v27
    %1276 = vmatprep.subr.mxu0 0.0
    %1277 = vmatpush2.msra.mxu0 0.0
    %1278 = vmatprep.subr.mxu0 0.0
    %1279 = vmatpush2.msra.mxu0 0.0
    %1280 = vmatprep.subr.mxu0 0.0
    %1281 = vmatpush2.msra.mxu0 0.0
    %1282 = vmatprep.subr.mxu0 0.0
    %1283 = vmatpush2.msra.mxu0 0.0
    %1284 = vmatprep.subr.mxu0 0.0
    %1285 = vmatpush2.msra.mxu0 0.0
    %1286 = vmatprep.subr.mxu0 0.0
    %1287 = vmatpush2.msra.mxu0 0.0
    %1288 = vmatprep.subr.mxu0 0.0
    %1289 = vmatpush2.msra.mxu0 0.0
    %1290 = vmatprep.subr.mxu0 0.0
    %1291 = vmatpush2.msra.mxu0 0.0
    %1292 = vmatprep.subr.mxu0 0.0
    %1293 = vmatpush2.msra.mxu0 0.0
    %1294 = vmatprep.subr.mxu0 0.0
    %1295 = vmatpush2.msra.mxu0 0.0
    %1296 = vmatprep.subr.mxu0 0.0
    %1297 = vmatpush2.msra.mxu0 0.0
    %1298 = vmatprep.subr.mxu0 0.0
    %1299 = vmatpush2.msra.mxu0 0.0
    %1300 = vmatprep.subr.mxu0 0.0
    %1301 = vmatpush2.msra.mxu0 0.0
    %1302 = vmatprep.subr.mxu0 0.0
    %1303 = vmatpush2.msra.mxu0 0.0
    %1304 = vmatprep.subr.mxu0 0.0
    %1305 = vmatpush2.msra.mxu0 0.0
    %1306 = vmatprep.subr.mxu0 0.0
    %1307 = vmatpush2.msra.mxu0 0.0
    %1308 = vmatprep.mubr.f32.mxu0 0.0
    %1309 = vmatmul.mubr.f32.gmra.mxu0 %v1151
    %v1310 = vpop.f32.mrf.mxu0
    %v1311 = vadd.f32 0.0, %v1310
    %v1312 = vpop.f32.mrf.mxu0
    %1313 = vdwg.mxu0
    %v1314 = vadd.f32 %v170, %v1311
    %v1315 = vtanh.pop %v1314
    %v1316 = vmul.f32 %v1315, %v191
    %v1317 = vadd.f32 %v1316, %v192
    %v1318 = vmul.f32 %v1317, %v1066
    %1320 = vrot.lane.b32.xlu0 %v1317, 32
    %v1321 = vpop.permute.xlu0 %1320
    %v1323 = vmul.f32 %v1317, %v1321
    %1325 = vrot.lane.b32.xlu0 %v1323, 32
    %v1326 = vpop.permute.xlu0 %1325
    %v1328 = vadd.f32 %v1318, %v1326
    %v1329 = vtanh.pop %v1328
    %1331 = vrot.lane.b32.xlu0 %v1329, 32
    %v1332 = vpop.permute.xlu0 %1331
    %v1334 = vmul.f32 %v1317, %v1332
    %1336 = vrot.lane.b32.xlu0 %v1243, 64
    %v1337 = vpop.permute.xlu0 %1336
    %v1338 = vsel %vm193, %v1337, 0
    %1340 = vmatprep.subr.mxu0 0.0
    %1341 = vmatpush1.msra.mxu0 0.0
    %1342 = vmatprep.subr.mxu0 0.0
    %1343 = vmatpush1.msra.mxu0 0.0
    %1344 = vmatprep.subr.mxu0 0.0
    %1345 = vmatpush1.msra.mxu0 0.0
    %1346 = vmatprep.subr.mxu0 0.0
    %1347 = vmatpush1.msra.mxu0 0.0
    %1348 = vmatprep.subr.mxu0 0.0
    %1349 = vmatpush1.msra.mxu0 0.0
    %1350 = vmatprep.subr.mxu0 0.0
    %1351 = vmatpush1.msra.mxu0 0.0
    %1352 = vmatprep.subr.mxu0 0.0
    %1353 = vmatpush1.msra.mxu0 0.0
    %1354 = vmatprep.subr.mxu0 0.0
    %1355 = vmatpush1.msra.mxu0 0.0
    %1356 = vmatprep.subr.mxu0 0.0
    %1357 = vmatpush1.msra.mxu0 0.0
    %1358 = vmatprep.subr.mxu0 0.0
    %1359 = vmatpush1.msra.mxu0 0.0
    %1360 = vmatprep.subr.mxu0 0.0
    %1361 = vmatpush1.msra.mxu0 0.0
    %1362 = vmatprep.subr.mxu0 0.0
    %1363 = vmatpush1.msra.mxu0 0.0
    %1364 = vmatprep.subr.mxu0 0.0
    %1365 = vmatpush1.msra.mxu0 %v39
    %1366 = vmatprep.subr.mxu0 0.0
    %1367 = vmatpush1.msra.mxu0 %v38
    %1368 = vmatprep.subr.mxu0 0.0
    %1369 = vmatpush1.msra.mxu0 %v37
    %1370 = vmatprep.subr.mxu0 0.0
    %1371 = vmatpush1.msra.mxu0 %v36
    %1372 = vmatprep.subr.mxu0 0.0
    %1373 = vmatpush2.msra.mxu0 0.0
    %1374 = vmatprep.subr.mxu0 0.0
    %1375 = vmatpush2.msra.mxu0 0.0
    %1376 = vmatprep.subr.mxu0 0.0
    %1377 = vmatpush2.msra.mxu0 0.0
    %1378 = vmatprep.subr.mxu0 0.0
    %1379 = vmatpush2.msra.mxu0 0.0
    %1380 = vmatprep.subr.mxu0 0.0
    %1381 = vmatpush2.msra.mxu0 0.0
    %1382 = vmatprep.subr.mxu0 0.0
    %1383 = vmatpush2.msra.mxu0 0.0
    %1384 = vmatprep.subr.mxu0 0.0
    %1385 = vmatpush2.msra.mxu0 0.0
    %1386 = vmatprep.subr.mxu0 0.0
    %1387 = vmatpush2.msra.mxu0 0.0
    %1388 = vmatprep.subr.mxu0 0.0
    %1389 = vmatpush2.msra.mxu0 0.0
    %1390 = vmatprep.subr.mxu0 0.0
    %1391 = vmatpush2.msra.mxu0 0.0
    %1392 = vmatprep.subr.mxu0 0.0
    %1393 = vmatpush2.msra.mxu0 0.0
    %1394 = vmatprep.subr.mxu0 0.0
    %1395 = vmatpush2.msra.mxu0 0.0
    %1396 = vmatprep.subr.mxu0 0.0
    %1397 = vmatpush2.msra.mxu0 0.0
    %1398 = vmatprep.subr.mxu0 0.0
    %1399 = vmatpush2.msra.mxu0 0.0
    %1400 = vmatprep.subr.mxu0 0.0
    %1401 = vmatpush2.msra.mxu0 0.0
    %1402 = vmatprep.subr.mxu0 0.0
    %1403 = vmatpush2.msra.mxu0 0.0
    %1404 = vmatprep.mubr.f32.mxu0 0.0
    %1405 = vmatmul.mubr.f32.gmra.mxu0 %v1338
    %v1406 = vpop.f32.mrf.mxu0
    %v1407 = vadd.f32 0.0, %v1406
    %v1408 = vpop.f32.mrf.mxu0
    %1409 = vdwg.mxu0
    %1411 = vrot.lane.b32.xlu0 %v1334, 64
    %v1412 = vpop.permute.xlu0 %1411
    %v1413 = vsel %vm193, %v1412, 0
    %1415 = vmatprep.subr.mxu0 0.0
    %1416 = vmatpush1.msra.mxu0 0.0
    %1417 = vmatprep.subr.mxu0 0.0
    %1418 = vmatpush1.msra.mxu0 0.0
    %1419 = vmatprep.subr.mxu0 0.0
    %1420 = vmatpush1.msra.mxu0 0.0
    %1421 = vmatprep.subr.mxu0 0.0
    %1422 = vmatpush1.msra.mxu0 0.0
    %1423 = vmatprep.subr.mxu0 0.0
    %1424 = vmatpush1.msra.mxu0 0.0
    %1425 = vmatprep.subr.mxu0 0.0
    %1426 = vmatpush1.msra.mxu0 0.0
    %1427 = vmatprep.subr.mxu0 0.0
    %1428 = vmatpush1.msra.mxu0 0.0
    %1429 = vmatprep.subr.mxu0 0.0
    %1430 = vmatpush1.msra.mxu0 0.0
    %1431 = vmatprep.subr.mxu0 0.0
    %1432 = vmatpush1.msra.mxu0 0.0
    %1433 = vmatprep.subr.mxu0 0.0
    %1434 = vmatpush1.msra.mxu0 0.0
    %1435 = vmatprep.subr.mxu0 0.0
    %1436 = vmatpush1.msra.mxu0 0.0
    %1437 = vmatprep.subr.mxu0 0.0
    %1438 = vmatpush1.msra.mxu0 0.0
    %1439 = vmatprep.subr.mxu0 0.0
    %1440 = vmatpush1.msra.mxu0 %v35
    %1441 = vmatprep.subr.mxu0 0.0
    %1442 = vmatpush1.msra.mxu0 %v34
    %1443 = vmatprep.subr.mxu0 0.0
    %1444 = vmatpush1.msra.mxu0 %v33
    %1445 = vmatprep.subr.mxu0 0.0
    %1446 = vmatpush1.msra.mxu0 %v32
    %1447 = vmatprep.subr.mxu0 0.0
    %1448 = vmatpush2.msra.mxu0 0.0
    %1449 = vmatprep.subr.mxu0 0.0
    %1450 = vmatpush2.msra.mxu0 0.0
    %1451 = vmatprep.subr.mxu0 0.0
    %1452 = vmatpush2.msra.mxu0 0.0
    %1453 = vmatprep.subr.mxu0 0.0
    %1454 = vmatpush2.msra.mxu0 0.0
    %1455 = vmatprep.subr.mxu0 0.0
    %1456 = vmatpush2.msra.mxu0 0.0
    %1457 = vmatprep.subr.mxu0 0.0
    %1458 = vmatpush2.msra.mxu0 0.0
    %1459 = vmatprep.subr.mxu0 0.0
    %1460 = vmatpush2.msra.mxu0 0.0
    %1461 = vmatprep.subr.mxu0 0.0
    %1462 = vmatpush2.msra.mxu0 0.0
    %1463 = vmatprep.subr.mxu0 0.0
    %1464 = vmatpush2.msra.mxu0 0.0
    %1465 = vmatprep.subr.mxu0 0.0
    %1466 = vmatpush2.msra.mxu0 0.0
    %1467 = vmatprep.subr.mxu0 0.0
    %1468 = vmatpush2.msra.mxu0 0.0
    %1469 = vmatprep.subr.mxu0 0.0
    %1470 = vmatpush2.msra.mxu0 0.0
    %1471 = vmatprep.subr.mxu0 0.0
    %1472 = vmatpush2.msra.mxu0 0.0
    %1473 = vmatprep.subr.mxu0 0.0
    %1474 = vmatpush2.msra.mxu0 0.0
    %1475 = vmatprep.subr.mxu0 0.0
    %1476 = vmatpush2.msra.mxu0 0.0
    %1477 = vmatprep.subr.mxu0 0.0
    %1478 = vmatpush2.msra.mxu0 0.0
    %1479 = vmatprep.mubr.f32.mxu0 0.0
    %1480 = vmatmul.mubr.f32.gmra.mxu0 %v1413
    %v1481 = vpop.f32.mrf.mxu0
    %v1482 = vadd.f32 %v1407, %v1481
    %v1483 = vpop.f32.mrf.mxu0
    %1484 = vdwg.mxu0
    %v1485 = vadd.f32 %v1482, %v436
    %v1486 = vtanh.pop %v1485
    %v1487 = vmul.f32 %v1486, %v191
    %v1488 = vadd.f32 %v1487, %v192
    %v1489 = vmul.f32 %v1488, %v1237
    %1491 = vrot.lane.b32.xlu0 %v1488, 32
    %v1492 = vpop.permute.xlu0 %1491
    %v1494 = vmul.f32 %v1488, %v1492
    %1496 = vrot.lane.b32.xlu0 %v1494, 32
    %v1497 = vpop.permute.xlu0 %1496
    %v1499 = vadd.f32 %v1489, %v1497
    %v1500 = vtanh.pop %v1499
    %1502 = vrot.lane.b32.xlu0 %v1500, 32
    %v1503 = vpop.permute.xlu0 %1502
    %v1505 = vmul.f32 %v1488, %v1503
    %1506 = vmatprep.subr.mxu0 0.0
    %1507 = vmatpush1.msra.mxu0 0.0
    %1508 = vmatprep.subr.mxu0 0.0
    %1509 = vmatpush1.msra.mxu0 0.0
    %1510 = vmatprep.subr.mxu0 0.0
    %1511 = vmatpush1.msra.mxu0 0.0
    %1512 = vmatprep.subr.mxu0 0.0
    %1513 = vmatpush1.msra.mxu0 0.0
    %1514 = vmatprep.subr.mxu0 0.0
    %1515 = vmatpush1.msra.mxu0 0.0
    %1516 = vmatprep.subr.mxu0 0.0
    %1517 = vmatpush1.msra.mxu0 0.0
    %1518 = vmatprep.subr.mxu0 0.0
    %1519 = vmatpush1.msra.mxu0 0.0
    %1520 = vmatprep.subr.mxu0 0.0
    %1521 = vmatpush1.msra.mxu0 0.0
    %1522 = vmatprep.subr.mxu0 0.0
    %1523 = vmatpush1.msra.mxu0 0.0
    %1524 = vmatprep.subr.mxu0 0.0
    %1525 = vmatpush1.msra.mxu0 0.0
    %1526 = vmatprep.subr.mxu0 0.0
    %1527 = vmatpush1.msra.mxu0 0.0
    %1528 = vmatprep.subr.mxu0 0.0
    %1529 = vmatpush1.msra.mxu0 0.0
    %1530 = vmatprep.subr.mxu0 0.0
    %1531 = vmatpush1.msra.mxu0 %v30
    %1532 = vmatprep.subr.mxu0 0.0
    %1533 = vmatpush1.msra.mxu0 %v29
    %1534 = vmatprep.subr.mxu0 0.0
    %1535 = vmatpush1.msra.mxu0 %v28
    %1536 = vmatprep.subr.mxu0 0.0
    %1537 = vmatpush1.msra.mxu0 %v27
    %1538 = vmatprep.subr.mxu0 0.0
    %1539 = vmatpush2.msra.mxu0 0.0
    %1540 = vmatprep.subr.mxu0 0.0
    %1541 = vmatpush2.msra.mxu0 0.0
    %1542 = vmatprep.subr.mxu0 0.0
    %1543 = vmatpush2.msra.mxu0 0.0
    %1544 = vmatprep.subr.mxu0 0.0
    %1545 = vmatpush2.msra.mxu0 0.0
    %1546 = vmatprep.subr.mxu0 0.0
    %1547 = vmatpush2.msra.mxu0 0.0
    %1548 = vmatprep.subr.mxu0 0.0
    %1549 = vmatpush2.msra.mxu0 0.0
    %1550 = vmatprep.subr.mxu0 0.0
    %1551 = vmatpush2.msra.mxu0 0.0
    %1552 = vmatprep.subr.mxu0 0.0
    %1553 = vmatpush2.msra.mxu0 0.0
    %1554 = vmatprep.subr.mxu0 0.0
    %1555 = vmatpush2.msra.mxu0 0.0
    %1556 = vmatprep.subr.mxu0 0.0
    %1557 = vmatpush2.msra.mxu0 0.0
    %1558 = vmatprep.subr.mxu0 0.0
    %1559 = vmatpush2.msra.mxu0 0.0
    %1560 = vmatprep.subr.mxu0 0.0
    %1561 = vmatpush2.msra.mxu0 0.0
    %1562 = vmatprep.subr.mxu0 0.0
    %1563 = vmatpush2.msra.mxu0 0.0
    %1564 = vmatprep.subr.mxu0 0.0
    %1565 = vmatpush2.msra.mxu0 0.0
    %1566 = vmatprep.subr.mxu0 0.0
    %1567 = vmatpush2.msra.mxu0 0.0
    %1568 = vmatprep.subr.mxu0 0.0
    %1569 = vmatpush2.msra.mxu0 0.0
    %1570 = vmatprep.mubr.f32.mxu0 0.0
    %1571 = vmatmul.mubr.f32.gmra.mxu0 %v1413
    %v1572 = vpop.f32.mrf.mxu0
    %v1573 = vadd.f32 0.0, %v1572
    %v1574 = vpop.f32.mrf.mxu0
    %1575 = vdwg.mxu0
    %v1576 = vadd.f32 %v175, %v1573
    %v1577 = vtanh.pop %v1576
    %v1578 = vmul.f32 %v1577, %v191
    %v1579 = vadd.f32 %v1578, %v192
    %v1580 = vmul.f32 %v1579, %v1328
    %1582 = vrot.lane.b32.xlu0 %v1579, 32
    %v1583 = vpop.permute.xlu0 %1582
    %v1585 = vmul.f32 %v1579, %v1583
    %1587 = vrot.lane.b32.xlu0 %v1585, 32
    %v1588 = vpop.permute.xlu0 %1587
    %v1590 = vadd.f32 %v1580, %v1588
    %v1591 = vtanh.pop %v1590
    %1593 = vrot.lane.b32.xlu0 %v1591, 32
    %v1594 = vpop.permute.xlu0 %1593
    %v1596 = vmul.f32 %v1579, %v1594
    %1598 = vrot.lane.b32.xlu0 %v1505, 64
    %v1599 = vpop.permute.xlu0 %1598
    %v1600 = vsel %vm193, %v1599, 0
    %1602 = vmatprep.subr.mxu0 0.0
    %1603 = vmatpush1.msra.mxu0 0.0
    %1604 = vmatprep.subr.mxu0 0.0
    %1605 = vmatpush1.msra.mxu0 0.0
    %1606 = vmatprep.subr.mxu0 0.0
    %1607 = vmatpush1.msra.mxu0 0.0
    %1608 = vmatprep.subr.mxu0 0.0
    %1609 = vmatpush1.msra.mxu0 0.0
    %1610 = vmatprep.subr.mxu0 0.0
    %1611 = vmatpush1.msra.mxu0 0.0
    %1612 = vmatprep.subr.mxu0 0.0
    %1613 = vmatpush1.msra.mxu0 0.0
    %1614 = vmatprep.subr.mxu0 0.0
    %1615 = vmatpush1.msra.mxu0 0.0
    %1616 = vmatprep.subr.mxu0 0.0
    %1617 = vmatpush1.msra.mxu0 0.0
    %1618 = vmatprep.subr.mxu0 0.0
    %1619 = vmatpush1.msra.mxu0 0.0
    %1620 = vmatprep.subr.mxu0 0.0
    %1621 = vmatpush1.msra.mxu0 0.0
    %1622 = vmatprep.subr.mxu0 0.0
    %1623 = vmatpush1.msra.mxu0 0.0
    %1624 = vmatprep.subr.mxu0 0.0
    %1625 = vmatpush1.msra.mxu0 0.0
    %1626 = vmatprep.subr.mxu0 0.0
    %1627 = vmatpush1.msra.mxu0 %v39
    %1628 = vmatprep.subr.mxu0 0.0
    %1629 = vmatpush1.msra.mxu0 %v38
    %1630 = vmatprep.subr.mxu0 0.0
    %1631 = vmatpush1.msra.mxu0 %v37
    %1632 = vmatprep.subr.mxu0 0.0
    %1633 = vmatpush1.msra.mxu0 %v36
    %1634 = vmatprep.subr.mxu0 0.0
    %1635 = vmatpush2.msra.mxu0 0.0
    %1636 = vmatprep.subr.mxu0 0.0
    %1637 = vmatpush2.msra.mxu0 0.0
    %1638 = vmatprep.subr.mxu0 0.0
    %1639 = vmatpush2.msra.mxu0 0.0
    %1640 = vmatprep.subr.mxu0 0.0
    %1641 = vmatpush2.msra.mxu0 0.0
    %1642 = vmatprep.subr.mxu0 0.0
    %1643 = vmatpush2.msra.mxu0 0.0
    %1644 = vmatprep.subr.mxu0 0.0
    %1645 = vmatpush2.msra.mxu0 0.0
    %1646 = vmatprep.subr.mxu0 0.0
    %1647 = vmatpush2.msra.mxu0 0.0
    %1648 = vmatprep.subr.mxu0 0.0
    %1649 = vmatpush2.msra.mxu0 0.0
    %1650 = vmatprep.subr.mxu0 0.0
    %1651 = vmatpush2.msra.mxu0 0.0
    %1652 = vmatprep.subr.mxu0 0.0
    %1653 = vmatpush2.msra.mxu0 0.0
    %1654 = vmatprep.subr.mxu0 0.0
    %1655 = vmatpush2.msra.mxu0 0.0
    %1656 = vmatprep.subr.mxu0 0.0
    %1657 = vmatpush2.msra.mxu0 0.0
    %1658 = vmatprep.subr.mxu0 0.0
    %1659 = vmatpush2.msra.mxu0 0.0
    %1660 = vmatprep.subr.mxu0 0.0
    %1661 = vmatpush2.msra.mxu0 0.0
    %1662 = vmatprep.subr.mxu0 0.0
    %1663 = vmatpush2.msra.mxu0 0.0
    %1664 = vmatprep.subr.mxu0 0.0
    %1665 = vmatpush2.msra.mxu0 0.0
    %1666 = vmatprep.mubr.f32.mxu0 0.0
    %1667 = vmatmul.mubr.f32.gmra.mxu0 %v1600
    %v1668 = vpop.f32.mrf.mxu0
    %v1669 = vadd.f32 0.0, %v1668
    %v1670 = vpop.f32.mrf.mxu0
    %1671 = vdwg.mxu0
    %1673 = vrot.lane.b32.xlu0 %v1596, 64
    %v1674 = vpop.permute.xlu0 %1673
    %v1675 = vsel %vm193, %v1674, 0
    %1677 = vmatprep.subr.mxu0 0.0
    %1678 = vmatpush1.msra.mxu0 0.0
    %1679 = vmatprep.subr.mxu0 0.0
    %1680 = vmatpush1.msra.mxu0 0.0
    %1681 = vmatprep.subr.mxu0 0.0
    %1682 = vmatpush1.msra.mxu0 0.0
    %1683 = vmatprep.subr.mxu0 0.0
    %1684 = vmatpush1.msra.mxu0 0.0
    %1685 = vmatprep.subr.mxu0 0.0
    %1686 = vmatpush1.msra.mxu0 0.0
    %1687 = vmatprep.subr.mxu0 0.0
    %1688 = vmatpush1.msra.mxu0 0.0
    %1689 = vmatprep.subr.mxu0 0.0
    %1690 = vmatpush1.msra.mxu0 0.0
    %1691 = vmatprep.subr.mxu0 0.0
    %1692 = vmatpush1.msra.mxu0 0.0
    %1693 = vmatprep.subr.mxu0 0.0
    %1694 = vmatpush1.msra.mxu0 0.0
    %1695 = vmatprep.subr.mxu0 0.0
    %1696 = vmatpush1.msra.mxu0 0.0
    %1697 = vmatprep.subr.mxu0 0.0
    %1698 = vmatpush1.msra.mxu0 0.0
    %1699 = vmatprep.subr.mxu0 0.0
    %1700 = vmatpush1.msra.mxu0 0.0
    %1701 = vmatprep.subr.mxu0 0.0
    %1702 = vmatpush1.msra.mxu0 %v35
    %1703 = vmatprep.subr.mxu0 0.0
    %1704 = vmatpush1.msra.mxu0 %v34
    %1705 = vmatprep.subr.mxu0 0.0
    %1706 = vmatpush1.msra.mxu0 %v33
    %1707 = vmatprep.subr.mxu0 0.0
    %1708 = vmatpush1.msra.mxu0 %v32
    %1709 = vmatprep.subr.mxu0 0.0
    %1710 = vmatpush2.msra.mxu0 0.0
    %1711 = vmatprep.subr.mxu0 0.0
    %1712 = vmatpush2.msra.mxu0 0.0
    %1713 = vmatprep.subr.mxu0 0.0
    %1714 = vmatpush2.msra.mxu0 0.0
    %1715 = vmatprep.subr.mxu0 0.0
    %1716 = vmatpush2.msra.mxu0 0.0
    %1717 = vmatprep.subr.mxu0 0.0
    %1718 = vmatpush2.msra.mxu0 0.0
    %1719 = vmatprep.subr.mxu0 0.0
    %1720 = vmatpush2.msra.mxu0 0.0
    %1721 = vmatprep.subr.mxu0 0.0
    %1722 = vmatpush2.msra.mxu0 0.0
    %1723 = vmatprep.subr.mxu0 0.0
    %1724 = vmatpush2.msra.mxu0 0.0
    %1725 = vmatprep.subr.mxu0 0.0
    %1726 = vmatpush2.msra.mxu0 0.0
    %1727 = vmatprep.subr.mxu0 0.0
    %1728 = vmatpush2.msra.mxu0 0.0
    %1729 = vmatprep.subr.mxu0 0.0
    %1730 = vmatpush2.msra.mxu0 0.0
    %1731 = vmatprep.subr.mxu0 0.0
    %1732 = vmatpush2.msra.mxu0 0.0
    %1733 = vmatprep.subr.mxu0 0.0
    %1734 = vmatpush2.msra.mxu0 0.0
    %1735 = vmatprep.subr.mxu0 0.0
    %1736 = vmatpush2.msra.mxu0 0.0
    %1737 = vmatprep.subr.mxu0 0.0
    %1738 = vmatpush2.msra.mxu0 0.0
    %1739 = vmatprep.subr.mxu0 0.0
    %1740 = vmatpush2.msra.mxu0 0.0
    %1741 = vmatprep.mubr.f32.mxu0 0.0
    %1742 = vmatmul.mubr.f32.gmra.mxu0 %v1675
    %v1743 = vpop.f32.mrf.mxu0
    %v1744 = vadd.f32 %v1669, %v1743
    %v1745 = vpop.f32.mrf.mxu0
    %1746 = vdwg.mxu0
    %v1747 = vadd.f32 %v1744, %v436
    %v1748 = vtanh.pop %v1747
    %v1749 = vmul.f32 %v1748, %v191
    %v1750 = vadd.f32 %v1749, %v192
    %v1751 = vmul.f32 %v1750, %v1499
    %1753 = vrot.lane.b32.xlu0 %v1750, 32
    %v1754 = vpop.permute.xlu0 %1753
    %v1756 = vmul.f32 %v1750, %v1754
    %1758 = vrot.lane.b32.xlu0 %v1756, 32
    %v1759 = vpop.permute.xlu0 %1758
    %v1761 = vadd.f32 %v1751, %v1759
    %v1762 = vtanh.pop %v1761
    %1764 = vrot.lane.b32.xlu0 %v1762, 32
    %v1765 = vpop.permute.xlu0 %1764
    %v1767 = vmul.f32 %v1750, %v1765
    %1768 = vmatprep.subr.mxu0 0.0
    %1769 = vmatpush1.msra.mxu0 0.0
    %1770 = vmatprep.subr.mxu0 0.0
    %1771 = vmatpush1.msra.mxu0 0.0
    %1772 = vmatprep.subr.mxu0 0.0
    %1773 = vmatpush1.msra.mxu0 0.0
    %1774 = vmatprep.subr.mxu0 0.0
    %1775 = vmatpush1.msra.mxu0 0.0
    %1776 = vmatprep.subr.mxu0 0.0
    %1777 = vmatpush1.msra.mxu0 0.0
    %1778 = vmatprep.subr.mxu0 0.0
    %1779 = vmatpush1.msra.mxu0 0.0
    %1780 = vmatprep.subr.mxu0 0.0
    %1781 = vmatpush1.msra.mxu0 0.0
    %1782 = vmatprep.subr.mxu0 0.0
    %1783 = vmatpush1.msra.mxu0 0.0
    %1784 = vmatprep.subr.mxu0 0.0
    %1785 = vmatpush1.msra.mxu0 0.0
    %1786 = vmatprep.subr.mxu0 0.0
    %1787 = vmatpush1.msra.mxu0 0.0
    %1788 = vmatprep.subr.mxu0 0.0
    %1789 = vmatpush1.msra.mxu0 0.0
    %1790 = vmatprep.subr.mxu0 0.0
    %1791 = vmatpush1.msra.mxu0 0.0
    %1792 = vmatprep.subr.mxu0 0.0
    %1793 = vmatpush1.msra.mxu0 %v30
    %1794 = vmatprep.subr.mxu0 0.0
    %1795 = vmatpush1.msra.mxu0 %v29
    %1796 = vmatprep.subr.mxu0 0.0
    %1797 = vmatpush1.msra.mxu0 %v28
    %1798 = vmatprep.subr.mxu0 0.0
    %1799 = vmatpush1.msra.mxu0 %v27
    %1800 = vmatprep.subr.mxu0 0.0
    %1801 = vmatpush2.msra.mxu0 0.0
    %1802 = vmatprep.subr.mxu0 0.0
    %1803 = vmatpush2.msra.mxu0 0.0
    %1804 = vmatprep.subr.mxu0 0.0
    %1805 = vmatpush2.msra.mxu0 0.0
    %1806 = vmatprep.subr.mxu0 0.0
    %1807 = vmatpush2.msra.mxu0 0.0
    %1808 = vmatprep.subr.mxu0 0.0
    %1809 = vmatpush2.msra.mxu0 0.0
    %1810 = vmatprep.subr.mxu0 0.0
    %1811 = vmatpush2.msra.mxu0 0.0
    %1812 = vmatprep.subr.mxu0 0.0
    %1813 = vmatpush2.msra.mxu0 0.0
    %1814 = vmatprep.subr.mxu0 0.0
    %1815 = vmatpush2.msra.mxu0 0.0
    %1816 = vmatprep.subr.mxu0 0.0
    %1817 = vmatpush2.msra.mxu0 0.0
    %1818 = vmatprep.subr.mxu0 0.0
    %1819 = vmatpush2.msra.mxu0 0.0
    %1820 = vmatprep.subr.mxu0 0.0
    %1821 = vmatpush2.msra.mxu0 0.0
    %1822 = vmatprep.subr.mxu0 0.0
    %1823 = vmatpush2.msra.mxu0 0.0
    %1824 = vmatprep.subr.mxu0 0.0
    %1825 = vmatpush2.msra.mxu0 0.0
    %1826 = vmatprep.subr.mxu0 0.0
    %1827 = vmatpush2.msra.mxu0 0.0
    %1828 = vmatprep.subr.mxu0 0.0
    %1829 = vmatpush2.msra.mxu0 0.0
    %1830 = vmatprep.subr.mxu0 0.0
    %1831 = vmatpush2.msra.mxu0 0.0
    %1832 = vmatprep.mubr.f32.mxu0 0.0
    %1833 = vmatmul.mubr.f32.gmra.mxu0 %v1675
    %v1834 = vpop.f32.mrf.mxu0
    %v1835 = vadd.f32 0.0, %v1834
    %v1836 = vpop.f32.mrf.mxu0
    %1837 = vdwg.mxu0
    %v1838 = vadd.f32 %v180, %v1835
    %v1839 = vtanh.pop %v1838
    %v1840 = vmul.f32 %v1839, %v191
    %v1841 = vadd.f32 %v1840, %v192
    %v1842 = vmul.f32 %v1841, %v1590
    %1844 = vrot.lane.b32.xlu0 %v1841, 32
    %v1845 = vpop.permute.xlu0 %1844
    %v1847 = vmul.f32 %v1841, %v1845
    %1849 = vrot.lane.b32.xlu0 %v1847, 32
    %v1850 = vpop.permute.xlu0 %1849
    %v1852 = vadd.f32 %v1842, %v1850
    %v1853 = vtanh.pop %v1852
    %1855 = vrot.lane.b32.xlu0 %v1853, 32
    %v1856 = vpop.permute.xlu0 %1855
    %v1858 = vmul.f32 %v1841, %v1856
    %1860 = vrot.lane.b32.xlu0 %v1767, 64
    %v1861 = vpop.permute.xlu0 %1860
    %v1862 = vsel %vm193, %v1861, 0
    %1864 = vmatprep.subr.mxu0 0.0
    %1865 = vmatpush1.msra.mxu0 0.0
    %1866 = vmatprep.subr.mxu0 0.0
    %1867 = vmatpush1.msra.mxu0 0.0
    %1868 = vmatprep.subr.mxu0 0.0
    %1869 = vmatpush1.msra.mxu0 0.0
    %1870 = vmatprep.subr.mxu0 0.0
    %1871 = vmatpush1.msra.mxu0 0.0
    %1872 = vmatprep.subr.mxu0 0.0
    %1873 = vmatpush1.msra.mxu0 0.0
    %1874 = vmatprep.subr.mxu0 0.0
    %1875 = vmatpush1.msra.mxu0 0.0
    %1876 = vmatprep.subr.mxu0 0.0
    %1877 = vmatpush1.msra.mxu0 0.0
    %1878 = vmatprep.subr.mxu0 0.0
    %1879 = vmatpush1.msra.mxu0 0.0
    %1880 = vmatprep.subr.mxu0 0.0
    %1881 = vmatpush1.msra.mxu0 0.0
    %1882 = vmatprep.subr.mxu0 0.0
    %1883 = vmatpush1.msra.mxu0 0.0
    %1884 = vmatprep.subr.mxu0 0.0
    %1885 = vmatpush1.msra.mxu0 0.0
    %1886 = vmatprep.subr.mxu0 0.0
    %1887 = vmatpush1.msra.mxu0 0.0
    %1888 = vmatprep.subr.mxu0 0.0
    %1889 = vmatpush1.msra.mxu0 %v39
    %1890 = vmatprep.subr.mxu0 0.0
    %1891 = vmatpush1.msra.mxu0 %v38
    %1892 = vmatprep.subr.mxu0 0.0
    %1893 = vmatpush1.msra.mxu0 %v37
    %1894 = vmatprep.subr.mxu0 0.0
    %1895 = vmatpush1.msra.mxu0 %v36
    %1896 = vmatprep.subr.mxu0 0.0
    %1897 = vmatpush2.msra.mxu0 0.0
    %1898 = vmatprep.subr.mxu0 0.0
    %1899 = vmatpush2.msra.mxu0 0.0
    %1900 = vmatprep.subr.mxu0 0.0
    %1901 = vmatpush2.msra.mxu0 0.0
    %1902 = vmatprep.subr.mxu0 0.0
    %1903 = vmatpush2.msra.mxu0 0.0
    %1904 = vmatprep.subr.mxu0 0.0
    %1905 = vmatpush2.msra.mxu0 0.0
    %1906 = vmatprep.subr.mxu0 0.0
    %1907 = vmatpush2.msra.mxu0 0.0
    %1908 = vmatprep.subr.mxu0 0.0
    %1909 = vmatpush2.msra.mxu0 0.0
    %1910 = vmatprep.subr.mxu0 0.0
    %1911 = vmatpush2.msra.mxu0 0.0
    %1912 = vmatprep.subr.mxu0 0.0
    %1913 = vmatpush2.msra.mxu0 0.0
    %1914 = vmatprep.subr.mxu0 0.0
    %1915 = vmatpush2.msra.mxu0 0.0
    %1916 = vmatprep.subr.mxu0 0.0
    %1917 = vmatpush2.msra.mxu0 0.0
    %1918 = vmatprep.subr.mxu0 0.0
    %1919 = vmatpush2.msra.mxu0 0.0
    %1920 = vmatprep.subr.mxu0 0.0
    %1921 = vmatpush2.msra.mxu0 0.0
    %1922 = vmatprep.subr.mxu0 0.0
    %1923 = vmatpush2.msra.mxu0 0.0
    %1924 = vmatprep.subr.mxu0 0.0
    %1925 = vmatpush2.msra.mxu0 0.0
    %1926 = vmatprep.subr.mxu0 0.0
    %1927 = vmatpush2.msra.mxu0 0.0
    %1928 = vmatprep.mubr.f32.mxu0 0.0
    %1929 = vmatmul.mubr.f32.gmra.mxu0 %v1862
    %v1930 = vpop.f32.mrf.mxu0
    %v1931 = vadd.f32 0.0, %v1930
    %v1932 = vpop.f32.mrf.mxu0
    %1933 = vdwg.mxu0
    %1935 = vrot.lane.b32.xlu0 %v1858, 64
    %v1936 = vpop.permute.xlu0 %1935
    %v1937 = vsel %vm193, %v1936, 0
    %1939 = vmatprep.subr.mxu0 0.0
    %1940 = vmatpush1.msra.mxu0 0.0
    %1941 = vmatprep.subr.mxu0 0.0
    %1942 = vmatpush1.msra.mxu0 0.0
    %1943 = vmatprep.subr.mxu0 0.0
    %1944 = vmatpush1.msra.mxu0 0.0
    %1945 = vmatprep.subr.mxu0 0.0
    %1946 = vmatpush1.msra.mxu0 0.0
    %1947 = vmatprep.subr.mxu0 0.0
    %1948 = vmatpush1.msra.mxu0 0.0
    %1949 = vmatprep.subr.mxu0 0.0
    %1950 = vmatpush1.msra.mxu0 0.0
    %1951 = vmatprep.subr.mxu0 0.0
    %1952 = vmatpush1.msra.mxu0 0.0
    %1953 = vmatprep.subr.mxu0 0.0
    %1954 = vmatpush1.msra.mxu0 0.0
    %1955 = vmatprep.subr.mxu0 0.0
    %1956 = vmatpush1.msra.mxu0 0.0
    %1957 = vmatprep.subr.mxu0 0.0
    %1958 = vmatpush1.msra.mxu0 0.0
    %1959 = vmatprep.subr.mxu0 0.0
    %1960 = vmatpush1.msra.mxu0 0.0
    %1961 = vmatprep.subr.mxu0 0.0
    %1962 = vmatpush1.msra.mxu0 0.0
    %1963 = vmatprep.subr.mxu0 0.0
    %1964 = vmatpush1.msra.mxu0 %v35
    %1965 = vmatprep.subr.mxu0 0.0
    %1966 = vmatpush1.msra.mxu0 %v34
    %1967 = vmatprep.subr.mxu0 0.0
    %1968 = vmatpush1.msra.mxu0 %v33
    %1969 = vmatprep.subr.mxu0 0.0
    %1970 = vmatpush1.msra.mxu0 %v32
    %1971 = vmatprep.subr.mxu0 0.0
    %1972 = vmatpush2.msra.mxu0 0.0
    %1973 = vmatprep.subr.mxu0 0.0
    %1974 = vmatpush2.msra.mxu0 0.0
    %1975 = vmatprep.subr.mxu0 0.0
    %1976 = vmatpush2.msra.mxu0 0.0
    %1977 = vmatprep.subr.mxu0 0.0
    %1978 = vmatpush2.msra.mxu0 0.0
    %1979 = vmatprep.subr.mxu0 0.0
    %1980 = vmatpush2.msra.mxu0 0.0
    %1981 = vmatprep.subr.mxu0 0.0
    %1982 = vmatpush2.msra.mxu0 0.0
    %1983 = vmatprep.subr.mxu0 0.0
    %1984 = vmatpush2.msra.mxu0 0.0
    %1985 = vmatprep.subr.mxu0 0.0
    %1986 = vmatpush2.msra.mxu0 0.0
    %1987 = vmatprep.subr.mxu0 0.0
    %1988 = vmatpush2.msra.mxu0 0.0
    %1989 = vmatprep.subr.mxu0 0.0
    %1990 = vmatpush2.msra.mxu0 0.0
    %1991 = vmatprep.subr.mxu0 0.0
    %1992 = vmatpush2.msra.mxu0 0.0
    %1993 = vmatprep.subr.mxu0 0.0
    %1994 = vmatpush2.msra.mxu0 0.0
    %1995 = vmatprep.subr.mxu0 0.0
    %1996 = vmatpush2.msra.mxu0 0.0
    %1997 = vmatprep.subr.mxu0 0.0
    %1998 = vmatpush2.msra.mxu0 0.0
    %1999 = vmatprep.subr.mxu0 0.0
    %2000 = vmatpush2.msra.mxu0 0.0
    %2001 = vmatprep.subr.mxu0 0.0
    %2002 = vmatpush2.msra.mxu0 0.0
    %2003 = vmatprep.mubr.f32.mxu0 0.0
    %2004 = vmatmul.mubr.f32.gmra.mxu0 %v1937
    %v2005 = vpop.f32.mrf.mxu0
    %v2006 = vadd.f32 %v1931, %v2005
    %v2007 = vpop.f32.mrf.mxu0
    %2008 = vdwg.mxu0
    %v2009 = vadd.f32 %v2006, %v436
    %v2010 = vtanh.pop %v2009
    %v2011 = vmul.f32 %v2010, %v191
    %v2012 = vadd.f32 %v2011, %v192
    %v2013 = vmul.f32 %v2012, %v1761
    %2015 = vrot.lane.b32.xlu0 %v2012, 32
    %v2016 = vpop.permute.xlu0 %2015
    %v2018 = vmul.f32 %v2012, %v2016
    %2020 = vrot.lane.b32.xlu0 %v2018, 32
    %v2021 = vpop.permute.xlu0 %2020
    %v2023 = vadd.f32 %v2013, %v2021
    %v2024 = vtanh.pop %v2023
    %2026 = vrot.lane.b32.xlu0 %v2024, 32
    %v2027 = vpop.permute.xlu0 %2026
    %v2029 = vmul.f32 %v2012, %v2027
    %2030 = vmatprep.subr.mxu0 0.0
    %2031 = vmatpush1.msra.mxu0 0.0
    %2032 = vmatprep.subr.mxu0 0.0
    %2033 = vmatpush1.msra.mxu0 0.0
    %2034 = vmatprep.subr.mxu0 0.0
    %2035 = vmatpush1.msra.mxu0 0.0
    %2036 = vmatprep.subr.mxu0 0.0
    %2037 = vmatpush1.msra.mxu0 0.0
    %2038 = vmatprep.subr.mxu0 0.0
    %2039 = vmatpush1.msra.mxu0 0.0
    %2040 = vmatprep.subr.mxu0 0.0
    %2041 = vmatpush1.msra.mxu0 0.0
    %2042 = vmatprep.subr.mxu0 0.0
    %2043 = vmatpush1.msra.mxu0 0.0
    %2044 = vmatprep.subr.mxu0 0.0
    %2045 = vmatpush1.msra.mxu0 0.0
    %2046 = vmatprep.subr.mxu0 0.0
    %2047 = vmatpush1.msra.mxu0 0.0
    %2048 = vmatprep.subr.mxu0 0.0
    %2049 = vmatpush1.msra.mxu0 0.0
    %2050 = vmatprep.subr.mxu0 0.0
    %2051 = vmatpush1.msra.mxu0 0.0
    %2052 = vmatprep.subr.mxu0 0.0
    %2053 = vmatpush1.msra.mxu0 0.0
    %2054 = vmatprep.subr.mxu0 0.0
    %2055 = vmatpush1.msra.mxu0 %v30
    %2056 = vmatprep.subr.mxu0 0.0
    %2057 = vmatpush1.msra.mxu0 %v29
    %2058 = vmatprep.subr.mxu0 0.0
    %2059 = vmatpush1.msra.mxu0 %v28
    %2060 = vmatprep.subr.mxu0 0.0
    %2061 = vmatpush1.msra.mxu0 %v27
    %2062 = vmatprep.subr.mxu0 0.0
    %2063 = vmatpush2.msra.mxu0 0.0
    %2064 = vmatprep.subr.mxu0 0.0
    %2065 = vmatpush2.msra.mxu0 0.0
    %2066 = vmatprep.subr.mxu0 0.0
    %2067 = vmatpush2.msra.mxu0 0.0
    %2068 = vmatprep.subr.mxu0 0.0
    %2069 = vmatpush2.msra.mxu0 0.0
    %2070 = vmatprep.subr.mxu0 0.0
    %2071 = vmatpush2.msra.mxu0 0.0
    %2072 = vmatprep.subr.mxu0 0.0
    %2073 = vmatpush2.msra.mxu0 0.0
    %2074 = vmatprep.subr.mxu0 0.0
    %2075 = vmatpush2.msra.mxu0 0.0
    %2076 = vmatprep.subr.mxu0 0.0
    %2077 = vmatpush2.msra.mxu0 0.0
    %2078 = vmatprep.subr.mxu0 0.0
    %2079 = vmatpush2.msra.mxu0 0.0
    %2080 = vmatprep.subr.mxu0 0.0
    %2081 = vmatpush2.msra.mxu0 0.0
    %2082 = vmatprep.subr.mxu0 0.0
    %2083 = vmatpush2.msra.mxu0 0.0
    %2084 = vmatprep.subr.mxu0 0.0
    %2085 = vmatpush2.msra.mxu0 0.0
    %2086 = vmatprep.subr.mxu0 0.0
    %2087 = vmatpush2.msra.mxu0 0.0
    %2088 = vmatprep.subr.mxu0 0.0
    %2089 = vmatpush2.msra.mxu0 0.0
    %2090 = vmatprep.subr.mxu0 0.0
    %2091 = vmatpush2.msra.mxu0 0.0
    %2092 = vmatprep.subr.mxu0 0.0
    %2093 = vmatpush2.msra.mxu0 0.0
    %2094 = vmatprep.mubr.f32.mxu0 0.0
    %2095 = vmatmul.mubr.f32.gmra.mxu0 %v1937
    %v2096 = vpop.f32.mrf.mxu0
    %v2097 = vadd.f32 0.0, %v2096
    %v2098 = vpop.f32.mrf.mxu0
    %2099 = vdwg.mxu0
    %v2100 = vadd.f32 %v185, %v2097
    %v2101 = vtanh.pop %v2100
    %v2102 = vmul.f32 %v2101, %v191
    %v2103 = vadd.f32 %v2102, %v192
    %v2104 = vmul.f32 %v2103, %v1852
    %2106 = vrot.lane.b32.xlu0 %v2103, 32
    %v2107 = vpop.permute.xlu0 %2106
    %v2109 = vmul.f32 %v2103, %v2107
    %2111 = vrot.lane.b32.xlu0 %v2109, 32
    %v2112 = vpop.permute.xlu0 %2111
    %v2114 = vadd.f32 %v2104, %v2112
    %v2115 = vtanh.pop %v2114
    %2117 = vrot.lane.b32.xlu0 %v2115, 32
    %v2118 = vpop.permute.xlu0 %2117
    %v2120 = vmul.f32 %v2103, %v2118
    %2122 = vrot.lane.b32.xlu0 %v2029, 64
    %v2123 = vpop.permute.xlu0 %2122
    %v2124 = vsel %vm193, %v2123, 0
    %2126 = vmatprep.subr.mxu0 0.0
    %2127 = vmatpush1.msra.mxu0 0.0
    %2128 = vmatprep.subr.mxu0 0.0
    %2129 = vmatpush1.msra.mxu0 0.0
    %2130 = vmatprep.subr.mxu0 0.0
    %2131 = vmatpush1.msra.mxu0 0.0
    %2132 = vmatprep.subr.mxu0 0.0
    %2133 = vmatpush1.msra.mxu0 0.0
    %2134 = vmatprep.subr.mxu0 0.0
    %2135 = vmatpush1.msra.mxu0 0.0
    %2136 = vmatprep.subr.mxu0 0.0
    %2137 = vmatpush1.msra.mxu0 0.0
    %2138 = vmatprep.subr.mxu0 0.0
    %2139 = vmatpush1.msra.mxu0 0.0
    %2140 = vmatprep.subr.mxu0 0.0
    %2141 = vmatpush1.msra.mxu0 0.0
    %2142 = vmatprep.subr.mxu0 0.0
    %2143 = vmatpush1.msra.mxu0 0.0
    %2144 = vmatprep.subr.mxu0 0.0
    %2145 = vmatpush1.msra.mxu0 0.0
    %2146 = vmatprep.subr.mxu0 0.0
    %2147 = vmatpush1.msra.mxu0 0.0
    %2148 = vmatprep.subr.mxu0 0.0
    %2149 = vmatpush1.msra.mxu0 0.0
    %2150 = vmatprep.subr.mxu0 0.0
    %2151 = vmatpush1.msra.mxu0 %v39
    %2152 = vmatprep.subr.mxu0 0.0
    %2153 = vmatpush1.msra.mxu0 %v38
    %2154 = vmatprep.subr.mxu0 0.0
    %2155 = vmatpush1.msra.mxu0 %v37
    %2156 = vmatprep.subr.mxu0 0.0
    %2157 = vmatpush1.msra.mxu0 %v36
    %2158 = vmatprep.subr.mxu0 0.0
    %2159 = vmatpush2.msra.mxu0 0.0
    %2160 = vmatprep.subr.mxu0 0.0
    %2161 = vmatpush2.msra.mxu0 0.0
    %2162 = vmatprep.subr.mxu0 0.0
    %2163 = vmatpush2.msra.mxu0 0.0
    %2164 = vmatprep.subr.mxu0 0.0
    %2165 = vmatpush2.msra.mxu0 0.0
    %2166 = vmatprep.subr.mxu0 0.0
    %2167 = vmatpush2.msra.mxu0 0.0
    %2168 = vmatprep.subr.mxu0 0.0
    %2169 = vmatpush2.msra.mxu0 0.0
    %2170 = vmatprep.subr.mxu0 0.0
    %2171 = vmatpush2.msra.mxu0 0.0
    %2172 = vmatprep.subr.mxu0 0.0
    %2173 = vmatpush2.msra.mxu0 0.0
    %2174 = vmatprep.subr.mxu0 0.0
    %2175 = vmatpush2.msra.mxu0 0.0
    %2176 = vmatprep.subr.mxu0 0.0
    %2177 = vmatpush2.msra.mxu0 0.0
    %2178 = vmatprep.subr.mxu0 0.0
    %2179 = vmatpush2.msra.mxu0 0.0
    %2180 = vmatprep.subr.mxu0 0.0
    %2181 = vmatpush2.msra.mxu0 0.0
    %2182 = vmatprep.subr.mxu0 0.0
    %2183 = vmatpush2.msra.mxu0 0.0
    %2184 = vmatprep.subr.mxu0 0.0
    %2185 = vmatpush2.msra.mxu0 0.0
    %2186 = vmatprep.subr.mxu0 0.0
    %2187 = vmatpush2.msra.mxu0 0.0
    %2188 = vmatprep.subr.mxu0 0.0
    %2189 = vmatpush2.msra.mxu0 0.0
    %2190 = vmatprep.mubr.f32.mxu0 0.0
    %2191 = vmatmul.mubr.f32.gmra.mxu0 %v2124
    %v2192 = vpop.f32.mrf.mxu0
    %v2193 = vadd.f32 0.0, %v2192
    %v2194 = vpop.f32.mrf.mxu0
    %2195 = vdwg.mxu0
    %2197 = vrot.lane.b32.xlu0 %v2120, 64
    %v2198 = vpop.permute.xlu0 %2197
    %v2199 = vsel %vm193, %v2198, 0
    %2201 = vmatprep.subr.mxu0 0.0
    %2202 = vmatpush1.msra.mxu0 0.0
    %2203 = vmatprep.subr.mxu0 0.0
    %2204 = vmatpush1.msra.mxu0 0.0
    %2205 = vmatprep.subr.mxu0 0.0
    %2206 = vmatpush1.msra.mxu0 0.0
    %2207 = vmatprep.subr.mxu0 0.0
    %2208 = vmatpush1.msra.mxu0 0.0
    %2209 = vmatprep.subr.mxu0 0.0
    %2210 = vmatpush1.msra.mxu0 0.0
    %2211 = vmatprep.subr.mxu0 0.0
    %2212 = vmatpush1.msra.mxu0 0.0
    %2213 = vmatprep.subr.mxu0 0.0
    %2214 = vmatpush1.msra.mxu0 0.0
    %2215 = vmatprep.subr.mxu0 0.0
    %2216 = vmatpush1.msra.mxu0 0.0
    %2217 = vmatprep.subr.mxu0 0.0
    %2218 = vmatpush1.msra.mxu0 0.0
    %2219 = vmatprep.subr.mxu0 0.0
    %2220 = vmatpush1.msra.mxu0 0.0
    %2221 = vmatprep.subr.mxu0 0.0
    %2222 = vmatpush1.msra.mxu0 0.0
    %2223 = vmatprep.subr.mxu0 0.0
    %2224 = vmatpush1.msra.mxu0 0.0
    %2225 = vmatprep.subr.mxu0 0.0
    %2226 = vmatpush1.msra.mxu0 %v35
    %2227 = vmatprep.subr.mxu0 0.0
    %2228 = vmatpush1.msra.mxu0 %v34
    %2229 = vmatprep.subr.mxu0 0.0
    %2230 = vmatpush1.msra.mxu0 %v33
    %2231 = vmatprep.subr.mxu0 0.0
    %2232 = vmatpush1.msra.mxu0 %v32
    %2233 = vmatprep.subr.mxu0 0.0
    %2234 = vmatpush2.msra.mxu0 0.0
    %2235 = vmatprep.subr.mxu0 0.0
    %2236 = vmatpush2.msra.mxu0 0.0
    %2237 = vmatprep.subr.mxu0 0.0
    %2238 = vmatpush2.msra.mxu0 0.0
    %2239 = vmatprep.subr.mxu0 0.0
    %2240 = vmatpush2.msra.mxu0 0.0
    %2241 = vmatprep.subr.mxu0 0.0
    %2242 = vmatpush2.msra.mxu0 0.0
    %2243 = vmatprep.subr.mxu0 0.0
    %2244 = vmatpush2.msra.mxu0 0.0
    %2245 = vmatprep.subr.mxu0 0.0
    %2246 = vmatpush2.msra.mxu0 0.0
    %2247 = vmatprep.subr.mxu0 0.0
    %2248 = vmatpush2.msra.mxu0 0.0
    %2249 = vmatprep.subr.mxu0 0.0
    %2250 = vmatpush2.msra.mxu0 0.0
    %2251 = vmatprep.subr.mxu0 0.0
    %2252 = vmatpush2.msra.mxu0 0.0
    %2253 = vmatprep.subr.mxu0 0.0
    %2254 = vmatpush2.msra.mxu0 0.0
    %2255 = vmatprep.subr.mxu0 0.0
    %2256 = vmatpush2.msra.mxu0 0.0
    %2257 = vmatprep.subr.mxu0 0.0
    %2258 = vmatpush2.msra.mxu0 0.0
    %2259 = vmatprep.subr.mxu0 0.0
    %2260 = vmatpush2.msra.mxu0 0.0
    %2261 = vmatprep.subr.mxu0 0.0
    %2262 = vmatpush2.msra.mxu0 0.0
    %2263 = vmatprep.subr.mxu0 0.0
    %2264 = vmatpush2.msra.mxu0 0.0
    %2265 = vmatprep.mubr.f32.mxu0 0.0
    %2266 = vmatmul.mubr.f32.gmra.mxu0 %v2199
    %v2267 = vpop.f32.mrf.mxu0
    %v2268 = vadd.f32 %v2193, %v2267
    %v2269 = vpop.f32.mrf.mxu0
    %2270 = vdwg.mxu0
    %v2271 = vadd.f32 %v2268, %v436
    %v2272 = vtanh.pop %v2271
    %v2273 = vmul.f32 %v2272, %v191
    %v2274 = vadd.f32 %v2273, %v192
    %v2275 = vmul.f32 %v2274, %v2023
    %2277 = vrot.lane.b32.xlu0 %v2274, 32
    %v2278 = vpop.permute.xlu0 %2277
    %v2280 = vmul.f32 %v2274, %v2278
    %2282 = vrot.lane.b32.xlu0 %v2280, 32
    %v2283 = vpop.permute.xlu0 %2282
    %v2285 = vadd.f32 %v2275, %v2283
    %v2286 = vtanh.pop %v2285
    %2288 = vrot.lane.b32.xlu0 %v2286, 32
    %v2289 = vpop.permute.xlu0 %2288
    %v2291 = vmul.f32 %v2274, %v2289
    %v2292 = vlaneseq
    %v2293 = vshrl.u32 %v2292, 7
    %v2294 = vsub.s32 0, %v2293
    %v2295 = vrot.slane %v45, %v2294
    %2297 = vrot.lane.b32.xlu0 %v2291, 64
    %v2298 = vpop.permute.xlu0 %2297
    %v2299 = vsel %vm193, %v2298, 0
    %2301 = vmatprep.subr.mxu0 0.0
    %2302 = vmatpush1.msra.mxu0 0.0
    %2303 = vmatprep.subr.mxu0 0.0
    %2304 = vmatpush1.msra.mxu0 0.0
    %2305 = vmatprep.subr.mxu0 0.0
    %2306 = vmatpush1.msra.mxu0 0.0
    %2307 = vmatprep.subr.mxu0 0.0
    %2308 = vmatpush1.msra.mxu0 0.0
    %2309 = vmatprep.subr.mxu0 0.0
    %2310 = vmatpush1.msra.mxu0 0.0
    %2311 = vmatprep.subr.mxu0 0.0
    %2312 = vmatpush1.msra.mxu0 0.0
    %2313 = vmatprep.subr.mxu0 0.0
    %2314 = vmatpush1.msra.mxu0 0.0
    %2315 = vmatprep.subr.mxu0 0.0
    %2316 = vmatpush1.msra.mxu0 0.0
    %2317 = vmatprep.subr.mxu0 0.0
    %2318 = vmatpush1.msra.mxu0 0.0
    %2319 = vmatprep.subr.mxu0 0.0
    %2320 = vmatpush1.msra.mxu0 0.0
    %2321 = vmatprep.subr.mxu0 0.0
    %2322 = vmatpush1.msra.mxu0 0.0
    %2323 = vmatprep.subr.mxu0 0.0
    %2324 = vmatpush1.msra.mxu0 0.0
    %2325 = vmatprep.subr.mxu0 0.0
    %2326 = vmatpush1.msra.mxu0 %v44
    %2327 = vmatprep.subr.mxu0 0.0
    %2328 = vmatpush1.msra.mxu0 %v43
    %2329 = vmatprep.subr.mxu0 0.0
    %2330 = vmatpush1.msra.mxu0 %v42
    %2331 = vmatprep.subr.mxu0 0.0
    %2332 = vmatpush1.msra.mxu0 %v41
    %2333 = vmatprep.subr.mxu0 0.0
    %2334 = vmatpush2.msra.mxu0 0.0
    %2335 = vmatprep.subr.mxu0 0.0
    %2336 = vmatpush2.msra.mxu0 0.0
    %2337 = vmatprep.subr.mxu0 0.0
    %2338 = vmatpush2.msra.mxu0 0.0
    %2339 = vmatprep.subr.mxu0 0.0
    %2340 = vmatpush2.msra.mxu0 0.0
    %2341 = vmatprep.subr.mxu0 0.0
    %2342 = vmatpush2.msra.mxu0 0.0
    %2343 = vmatprep.subr.mxu0 0.0
    %2344 = vmatpush2.msra.mxu0 0.0
    %2345 = vmatprep.subr.mxu0 0.0
    %2346 = vmatpush2.msra.mxu0 0.0
    %2347 = vmatprep.subr.mxu0 0.0
    %2348 = vmatpush2.msra.mxu0 0.0
    %2349 = vmatprep.subr.mxu0 0.0
    %2350 = vmatpush2.msra.mxu0 0.0
    %2351 = vmatprep.subr.mxu0 0.0
    %2352 = vmatpush2.msra.mxu0 0.0
    %2353 = vmatprep.subr.mxu0 0.0
    %2354 = vmatpush2.msra.mxu0 0.0
    %2355 = vmatprep.subr.mxu0 0.0
    %2356 = vmatpush2.msra.mxu0 0.0
    %2357 = vmatprep.subr.mxu0 0.0
    %2358 = vmatpush2.msra.mxu0 0.0
    %2359 = vmatprep.subr.mxu0 0.0
    %2360 = vmatpush2.msra.mxu0 0.0
    %2361 = vmatprep.subr.mxu0 0.0
    %2362 = vmatpush2.msra.mxu0 0.0
    %2363 = vmatprep.subr.mxu0 0.0
    %2364 = vmatpush2.msra.mxu0 0.0
    %2365 = vmatprep.mubr.f32.mxu0 0.0
    %2366 = vmatmul.mubr.f32.gmra.mxu0 %v2299
    %v2367 = vpop.f32.mrf.mxu0
    %v2368 = vadd.f32 %v2295, %v2367
    %v2369 = vpop.f32.mrf.mxu0
    %2370 = vdwg.mxu0
    %2371 = vst [vmem:[#allocation5] sm:$0xff] %v2368
    // Predicated region
    $region14: #{tpu_custom_call.1} parent=1 // pred_check
      _
    $region15: #{tpu_custom_call.1} parent=1 // pred_check_branch
      %2373 = sbr.rel (0) target = $region17
    $region16: #{tpu_custom_call.1} parent=1 // pred_region
      %s2375 = ssub.s32 128, 128
      %2376 = vsyncadd [#allocation4], %s2375
      %s2378 = sshll.u32 [#allocation5], 4
      %s2379 = int_to_ptr.vmem [resolvable:$true] %s2378
      %2381 = dma.vmem_to_hbm [thread:$0]  %s2379, 128, %s2, [#allocation4]
    $region17: #{tpu_custom_call.1} parent=1 // pred_fallthru
      _
    // Predicated region
    $region18: #{tpu_custom_call.1} parent=1 // pred_check
      _
    $region19: #{tpu_custom_call.1} parent=1 // pred_check_branch
      %2383 = sbr.rel (0) target = $region21
    $region20: #{tpu_custom_call.1} parent=1 // pred_region
      %2384 = dma.done [#allocation4], 128
    $region21: #{tpu_custom_call.1} parent=1 // pred_fallthru
      _
    %2385 = vsyncpa [#allocation3], 1
    %2386 = vsyncpa [#allocation4], 1

</llo_original>
